<compile_context>
chip_gen: v7x
topology: tpu7x:2x2x1
jax: 0.10.0
libtpu: 0.0.40
codegen_flags: <defaults>
</compile_context>

<pallas_src>
import jax
import jax.numpy as jnp
from jax.experimental import pallas as pl
from jax.experimental.pallas import tpu as pltpu


_SQRT_2_OVER_PI = 0.7978845608028654


def _gelu(x):
    # tanh-approximate gelu: one EUP tanh + a few VPU ops (max dev ~1e-3).
    return 0.5 * x * (1.0 + jnp.tanh(_SQRT_2_OVER_PI * (x + 0.044715 * x * x * x)))


def _images_per_step(N, C, HW):
    """Images per grid step: amortize step overhead, stay inside scoped VMEM."""
    per_img = C * HW * (4 + 2) * 2          # double-buffered f32 in + bf16 out
    B = max(1, min(N, 8, (20 << 20) // max(per_img, 1)))
    while N % B:                             # B must divide N
        B -= 1
    return B


# ----------------------------------------------------------------------------
# Kernel 1: fused conv_a..conv_d (+ residual) for B images per grid step.
# Channel-major activations (C, HW); emits pre-BN y (bf16) and per-image
# BatchNorm partial statistics (f32).
# ----------------------------------------------------------------------------
def _make_block_kernel(B, H, W, C, Cm, residual, y_dtype):
    HW = H * W

    def kernel(x_ref, wa_ref, ba_ref, wb_ref, bb_ref, wc_ref, bc_ref,
               wd_ref, bd_ref, y_ref, st_ref):
        # --- per-pixel tap-validity masks (shared by all images in the step)
        p = jax.lax.broadcasted_iota(jnp.int32, (1, HW), 1)
        wcol = p % W
        col_m = [(wcol >= 1), None, (wcol <= W - 2)]      # dx offset -1, 0, +1
        row_m = [(p >= W), None, (p < HW - W)]            # dy offset -1, 0, +1
        tap_mask = []
        for dy in range(3):
            for dx in range(3):
                r, c = row_m[dy], col_m[dx]
                if r is None and c is None:
                    tap_mask.append(None)
                elif r is None:
                    tap_mask.append(c.astype(jnp.float32))
                elif c is None:
                    tap_mask.append(r.astype(jnp.float32))
                else:
                    tap_mask.append(jnp.logical_and(r, c).astype(jnp.float32))

        # Hoist weight / bias reads out of the unrolled image loop.
        wa, ba = wa_ref[...], ba_ref[...]
        wb, bb = wb_ref[...], bb_ref[...]
        wc, bc = wc_ref[...], bc_ref[...]
        wd, bd = wd_ref[...], bd_ref[...]

        def conv3x3_gelu(act, w_stacked, bias):
            # act: (Cm, HW) f32.  Build the 9 shifted taps with lane rolls,
            # mask image borders, stack along the contraction dim and do ONE
            # (Cm, 9*Cm) x (9*Cm, HW) MXU matmul.
            pieces = []
            for dy in range(3):
                for dx in range(3):
                    s = (dy - 1) * W + (dx - 1)
                    piece = act if s == 0 else pltpu.roll(act, (-s) % HW, axis=1)
                    m = tap_mask[dy * 3 + dx]
                    if m is not None:
                        piece = piece * m
                    pieces.append(piece)
            stacked = jnp.concatenate(pieces, axis=0).astype(jnp.bfloat16)
            out = jnp.dot(w_stacked, stacked, preferred_element_type=jnp.float32)
            return _gelu(out + bias)

        for b in range(B):                                  # statically unrolled
            x = x_ref[b]                                    # (C, HW) f32

            # conv_a (1x1) + gelu
            h = jnp.dot(wa, x.astype(jnp.bfloat16),
                        preferred_element_type=jnp.float32)
            h = _gelu(h + ba)

            # conv_b / conv_c (3x3, pad=1) + gelu
            h = conv3x3_gelu(h, wb, bb)
            h = conv3x3_gelu(h, wc, bc)

            # conv_d (1x1) + residual
            y = jnp.dot(wd, h.astype(jnp.bfloat16),
                        preferred_element_type=jnp.float32) + bd
            if residual:
                y = y + x
            y_ref[b] = y.astype(y_dtype)

            # Per-image partial BatchNorm statistics (sum, sum of squares).
            st_ref[b] = jnp.concatenate(
                [jnp.sum(y, axis=1, keepdims=True),
                 jnp.sum(y * y, axis=1, keepdims=True)], axis=1)   # (C, 2)

    return kernel


def _fused_block(x3, wa, ba, wbs, bb, wcs, bc, wd, bd, *, H, W, B, residual):
    N, C, HW = x3.shape
    Cm = wa.shape[0]
    y_dtype = jnp.bfloat16
    kernel = _make_block_kernel(B, H, W, C, Cm, residual, y_dtype)

    weights = [wa, ba, wbs, bb, wcs, bc, wd, bd]

    def full(a):
        return pl.BlockSpec(a.shape, lambda g: (0,) * a.ndim)

    # Per-step VMEM: double-buffered x (f32) + y (bf16) blocks, weights,
    # and the live per-image intermediates (stacked taps, h, y).
    est = (2 * B * C * HW * (4 + 2)
           + 2 * sum(int(w.size) * w.dtype.itemsize for w in weights)
           + (9 * Cm * 6 + 4 * Cm * 4 + 4 * C * 4) * HW
           + (2 << 20))
    vmem_limit = int(min(max(est, 16 << 20), 32 << 20))

    y3, stats = pl.pallas_call(
        kernel,
        out_shape=(jax.ShapeDtypeStruct((N, C, HW), y_dtype),
                   jax.ShapeDtypeStruct((N, C, 2), jnp.float32)),
        grid=(N // B,),
        in_specs=[pl.BlockSpec((B, C, HW), lambda g: (g, 0, 0))]
                 + [full(w) for w in weights],
        out_specs=(pl.BlockSpec((B, C, HW), lambda g: (g, 0, 0)),
                   pl.BlockSpec((B, C, 2), lambda g: (g, 0, 0))),
        compiler_params=pltpu.CompilerParams(
            dimension_semantics=("parallel",),
            vmem_limit_bytes=vmem_limit),
    )(x3, *weights)
    return y3, stats


# ----------------------------------------------------------------------------
# Kernel 2: lane-dense BatchNorm apply + gelu (channel-major, B images/step).
# ----------------------------------------------------------------------------
def _bn_gelu_kernel(y_ref, scale_ref, shift_ref, o_ref):
    y = y_ref[...].astype(jnp.float32)
    o_ref[...] = _gelu(y * scale_ref[...] + shift_ref[...])


def _bn_gelu(y3, scale3, shift3, B):
    N, C, HW = y3.shape
    return pl.pallas_call(
        _bn_gelu_kernel,
        out_shape=jax.ShapeDtypeStruct((N, C, HW), jnp.float32),
        grid=(N // B,),
        in_specs=[pl.BlockSpec((B, C, HW), lambda g: (g, 0, 0)),
                  pl.BlockSpec((1, C, 1), lambda g: (0, 0, 0)),
                  pl.BlockSpec((1, C, 1), lambda g: (0, 0, 0))],
        out_specs=pl.BlockSpec((B, C, HW), lambda g: (g, 0, 0)),
        compiler_params=pltpu.CompilerParams(
            dimension_semantics=("parallel",)),
    )(y3, scale3, shift3)


# ----------------------------------------------------------------------------
# Host wrapper (weight prep, BN statistics reduction).  NCHW in / NCHW out;
# only free reshapes on the data path (no host transposes).
# ----------------------------------------------------------------------------
def decoding_block_forward(x_nchw, params, *, residual=True, up_rate=None):
    """Pallas implementation of DecodingBlock.forward (NCHW in / NCHW out)."""
    x = x_nchw.astype(jnp.float32)
    if up_rate is not None:
        # TODO(synk): fuse the nearest-neighbour upsample into kernel-1 input
        # indexing instead of materialising the upsampled tensor on the host.
        x = jnp.repeat(jnp.repeat(x, up_rate, axis=2), up_rate, axis=3)
    N, C, H, W = x.shape
    Cm = params['wa'].shape[0]
    assert params['wb'].shape[-1] == 3, "kernel only implements kernel_size=3"

    HW = H * W
    x3 = x.reshape(N, C, HW)                 # free reshape; channel-major
    B = _images_per_step(N, C, HW)

    # Host-side weight prep (once per call): bf16 MXU operands, f32 biases.
    # 3x3 weights are pre-stacked to (Cm, 9*Cm), tap index t = dy*3 + dx.
    def stack3x3(w):                         # torch layout (Cout, Cin, 3, 3)
        co, ci = w.shape[0], w.shape[1]
        return jnp.transpose(w, (0, 2, 3, 1)).reshape(co, 9 * ci).astype(jnp.bfloat16)

    wa = params['wa'][:, :, 0, 0].astype(jnp.bfloat16)          # (Cm, C)
    wd = params['wd'][:, :, 0, 0].astype(jnp.bfloat16)          # (C, Cm)
    wbs, wcs = stack3x3(params['wb']), stack3x3(params['wc'])
    ba = params['ba'][:, None].astype(jnp.float32)              # (Cm, 1)
    bb = params['bb'][:, None].astype(jnp.float32)
    bc = params['bc'][:, None].astype(jnp.float32)
    bd = params['bd'][:, None].astype(jnp.float32)              # (C, 1)

    y3, stats = _fused_block(x3, wa, ba, wbs, bb, wcs, bc, wd, bd,
                             H=H, W=W, B=B, residual=residual)

    # BatchNorm2d training-mode statistics from the per-image partial sums
    # (a handful of O(C) ops between the two kernels).
    R = N * HW
    tot = jnp.sum(stats, axis=0)                         # (C, 2)
    mean = tot[:, 0] / R
    var = jnp.maximum(tot[:, 1] / R - mean * mean, 0.0)  # biased variance
    scale = params['gamma'] * jax.lax.rsqrt(var + 1e-5)
    shift = params['beta'] - mean * scale
    scale3 = scale.reshape(1, C, 1).astype(jnp.float32)
    shift3 = shift.reshape(1, C, 1).astype(jnp.float32)

    out = _bn_gelu(y3, scale3, shift3, B)                # (N, C, HW) f32
    return out.reshape(N, C, H, W)                       # NCHW (free reshape)


# ----------------------------------------------------------------------------
# Pure-JAX reference (for a self-consistency check)
# ----------------------------------------------------------------------------
def reference_forward(x_nchw, params, *, residual=True, up_rate=None):
    x = jnp.transpose(x_nchw, (0, 2, 3, 1)).astype(jnp.float32)
    if up_rate is not None:
        x = jnp.repeat(jnp.repeat(x, up_rate, axis=1), up_rate, axis=2)
    res = x

    def conv(v, w, b, pad):
        y = jax.lax.conv_general_dilated(
            v, jnp.transpose(w, (2, 3, 1, 0)), window_strides=(1, 1),
            padding=[(pad, pad), (pad, pad)],
            dimension_numbers=('NHWC', 'HWIO', 'NHWC'))
        return y + b

    gelu = lambda v: jax.nn.gelu(v, approximate=False)
    x = gelu(conv(x, params['wa'], params['ba'], 0))
    x = gelu(conv(x, params['wb'], params['bb'], 1))
    x = gelu(conv(x, params['wc'], params['bc'], 1))
    x = conv(x, params['wd'], params['bd'], 0)
    if residual:
        x = x + res
    mean = jnp.mean(x, axis=(0, 1, 2))
    var = jnp.mean(jnp.square(x - mean), axis=(0, 1, 2))
    x = (x - mean) * jax.lax.rsqrt(var + 1e-5) * params['gamma'] + params['beta']
    x = gelu(x)
    return jnp.transpose(x, (0, 3, 1, 2))


# ----------------------------------------------------------------------------
if __name__ == "__main__":
    key = jax.random.PRNGKey(0)
    keys = jax.random.split(key, 12)

    # DecodingBlock(res=16, num_channels=32, bottleneck_ratio=0.25,
    #               kernel_size=3, residual=True, up_rate=None)
    N, C, H, W = 2, 32, 16, 16
    Cm = int(C * 0.25)

    x = jax.random.normal(keys[0], (N, C, H, W), jnp.float32)       # NCHW input

    params = dict(
        wa=0.1 * jax.random.normal(keys[1], (Cm, C, 1, 1), jnp.float32),
        ba=0.05 * jax.random.normal(keys[2], (Cm,), jnp.float32),
        wb=0.1 * jax.random.normal(keys[3], (Cm, Cm, 3, 3), jnp.float32),
        bb=0.05 * jax.random.normal(keys[4], (Cm,), jnp.float32),
        wc=0.1 * jax.random.normal(keys[5], (Cm, Cm, 3, 3), jnp.float32),
        bc=0.05 * jax.random.normal(keys[6], (Cm,), jnp.float32),
        wd=0.1 * jax.random.normal(keys[7], (C, Cm, 1, 1), jnp.float32),
        bd=0.05 * jax.random.normal(keys[8], (C,), jnp.float32),
        gamma=1.0 + 0.1 * jax.random.normal(keys[9], (C,), jnp.float32),
        beta=0.05 * jax.random.normal(keys[10], (C,), jnp.float32),
    )

    fwd = jax.jit(decoding_block_forward, static_argnames=("residual", "up_rate"))
    out = jax.block_until_ready(fwd(x, params, residual=True, up_rate=None))

    ref = reference_forward(x, params, residual=True, up_rate=None)
    assert out.shape == (N, C, H, W), out.shape
    err = float(jnp.max(jnp.abs(out - ref)))
    # Tolerance covers bf16 matmul operands, the bf16 inter-kernel y tensor
    # and the tanh-approximate gelu.
    assert err < 5e-2, f"max abs error vs reference: {err}"

    print("KERNEL_OK")
</pallas_src>

<mosaic_0001>
module attributes {stable_mosaic.version = 11 : i64} {
  func.func @kernel(%arg0: i32, %arg1: memref<2x32x256xf32, #tpu.memory_space<vmem>>, %arg2: memref<8x32xbf16, #tpu.memory_space<vmem>>, %arg3: memref<8x1xf32, #tpu.memory_space<vmem>>, %arg4: memref<8x72xbf16, #tpu.memory_space<vmem>>, %arg5: memref<8x1xf32, #tpu.memory_space<vmem>>, %arg6: memref<8x72xbf16, #tpu.memory_space<vmem>>, %arg7: memref<8x1xf32, #tpu.memory_space<vmem>>, %arg8: memref<32x8xbf16, #tpu.memory_space<vmem>>, %arg9: memref<32x1xf32, #tpu.memory_space<vmem>>, %arg10: memref<2x32x256xbf16, #tpu.memory_space<vmem>>, %arg11: memref<2x32x2xf32, #tpu.memory_space<vmem>>) attributes {dimension_semantics = [#tpu.dimension_semantics<parallel>], iteration_bounds = array<i64: 1>, scalar_prefetch = 0 : i64, scratch_operands = 0 : i64, tpu.core_type = #tpu.core_type<tc>, window_params = [{transform_indices = @transform_0, window_bounds = array<i64: 2, 32, 256>}, {pipeline_mode = #tpu.pipeline_mode<synchronous>, transform_indices = @transform_1, window_bounds = array<i64: 8, 32>}, {pipeline_mode = #tpu.pipeline_mode<synchronous>, transform_indices = @transform_2, window_bounds = array<i64: 8, 1>}, {pipeline_mode = #tpu.pipeline_mode<synchronous>, transform_indices = @transform_3, window_bounds = array<i64: 8, 72>}, {pipeline_mode = #tpu.pipeline_mode<synchronous>, transform_indices = @transform_4, window_bounds = array<i64: 8, 1>}, {pipeline_mode = #tpu.pipeline_mode<synchronous>, transform_indices = @transform_5, window_bounds = array<i64: 8, 72>}, {pipeline_mode = #tpu.pipeline_mode<synchronous>, transform_indices = @transform_6, window_bounds = array<i64: 8, 1>}, {pipeline_mode = #tpu.pipeline_mode<synchronous>, transform_indices = @transform_7, window_bounds = array<i64: 32, 8>}, {pipeline_mode = #tpu.pipeline_mode<synchronous>, transform_indices = @transform_8, window_bounds = array<i64: 32, 1>}, {transform_indices = @transform_9, window_bounds = array<i64: 2, 32, 256>}, {transform_indices = @transform_10, window_bounds = array<i64: 2, 32, 2>}]} {
    %0 = tpu.iota {dimensions = array<i32: 1>} : vector<1x256xi32>
    %c16_i32 = arith.constant 16 : i32
    %c0_i32 = arith.constant 0 : i32
    %1 = arith.cmpi eq, %c16_i32, %c0_i32 : i32
    %c1_i32 = arith.constant 1 : i32
    %2 = arith.select %1, %c1_i32, %c16_i32 : i32
    %3 = vector.broadcast %2 : i32 to vector<1x256xi32>
    %4 = arith.remsi %0, %3 : vector<1x256xi32>
    %c0_i32_0 = arith.constant 0 : i32
    %5 = vector.broadcast %c0_i32_0 : i32 to vector<1x256xi32>
    %6 = arith.cmpi ne, %4, %5 : vector<1x256xi32>
    %c0_i32_1 = arith.constant 0 : i32
    %7 = vector.broadcast %c0_i32_1 : i32 to vector<1x256xi32>
    %8 = arith.cmpi slt, %4, %7 : vector<1x256xi32>
    %c0_i32_2 = arith.constant 0 : i32
    %9 = arith.cmpi slt, %2, %c0_i32_2 : i32
    %10 = vector.broadcast %9 : i1 to vector<1x256xi1>
    %11 = vector.broadcast %10 : vector<1x256xi1> to vector<1x256xi1>
    %12 = arith.xori %8, %11 : vector<1x256xi1>
    %13 = arith.andi %12, %6 : vector<1x256xi1>
    %14 = vector.broadcast %2 : i32 to vector<1x256xi32>
    %15 = arith.addi %4, %14 : vector<1x256xi32>
    %16 = arith.select %13, %15, %4 : vector<1x256xi1>, vector<1x256xi32>
    %c1_i32_3 = arith.constant 1 : i32
    %17 = vector.broadcast %c1_i32_3 : i32 to vector<1x256xi32>
    %18 = arith.cmpi sge, %16, %17 : vector<1x256xi32>
    %c14_i32 = arith.constant 14 : i32
    %19 = vector.broadcast %c14_i32 : i32 to vector<1x256xi32>
    %20 = arith.cmpi sle, %16, %19 : vector<1x256xi32>
    %c16_i32_4 = arith.constant 16 : i32
    %21 = vector.broadcast %c16_i32_4 : i32 to vector<1x256xi32>
    %22 = arith.cmpi sge, %0, %21 : vector<1x256xi32>
    %c240_i32 = arith.constant 240 : i32
    %23 = vector.broadcast %c240_i32 : i32 to vector<1x256xi32>
    %24 = arith.cmpi slt, %0, %23 : vector<1x256xi32>
    %25 = arith.andi %22, %18 : vector<1x256xi1>
    %26 = arith.extui %25 : vector<1x256xi1> to vector<1x256xi32>
    %27 = arith.sitofp %26 : vector<1x256xi32> to vector<1x256xf32>
    %28 = arith.extui %22 : vector<1x256xi1> to vector<1x256xi32>
    %29 = arith.sitofp %28 : vector<1x256xi32> to vector<1x256xf32>
    %30 = arith.andi %22, %20 : vector<1x256xi1>
    %31 = arith.extui %30 : vector<1x256xi1> to vector<1x256xi32>
    %32 = arith.sitofp %31 : vector<1x256xi32> to vector<1x256xf32>
    %33 = arith.extui %18 : vector<1x256xi1> to vector<1x256xi32>
    %34 = arith.sitofp %33 : vector<1x256xi32> to vector<1x256xf32>
    %35 = arith.extui %20 : vector<1x256xi1> to vector<1x256xi32>
    %36 = arith.sitofp %35 : vector<1x256xi32> to vector<1x256xf32>
    %37 = arith.andi %24, %18 : vector<1x256xi1>
    %38 = arith.extui %37 : vector<1x256xi1> to vector<1x256xi32>
    %39 = arith.sitofp %38 : vector<1x256xi32> to vector<1x256xf32>
    %40 = arith.extui %24 : vector<1x256xi1> to vector<1x256xi32>
    %41 = arith.sitofp %40 : vector<1x256xi32> to vector<1x256xf32>
    %42 = arith.andi %24, %20 : vector<1x256xi1>
    %43 = arith.extui %42 : vector<1x256xi1> to vector<1x256xi32>
    %44 = arith.sitofp %43 : vector<1x256xi32> to vector<1x256xf32>
    %c0 = arith.constant 0 : index
    %c0_5 = arith.constant 0 : index
    %45 = vector.load %arg2[%c0, %c0_5] : memref<8x32xbf16, #tpu.memory_space<vmem>>, vector<8x32xbf16>
    %c0_6 = arith.constant 0 : index
    %c0_7 = arith.constant 0 : index
    %46 = vector.load %arg3[%c0_6, %c0_7] : memref<8x1xf32, #tpu.memory_space<vmem>>, vector<8x1xf32>
    %c0_8 = arith.constant 0 : index
    %c0_9 = arith.constant 0 : index
    %47 = vector.load %arg4[%c0_8, %c0_9] : memref<8x72xbf16, #tpu.memory_space<vmem>>, vector<8x72xbf16>
    %c0_10 = arith.constant 0 : index
    %c0_11 = arith.constant 0 : index
    %48 = vector.load %arg5[%c0_10, %c0_11] : memref<8x1xf32, #tpu.memory_space<vmem>>, vector<8x1xf32>
    %c0_12 = arith.constant 0 : index
    %c0_13 = arith.constant 0 : index
    %49 = vector.load %arg6[%c0_12, %c0_13] : memref<8x72xbf16, #tpu.memory_space<vmem>>, vector<8x72xbf16>
    %c0_14 = arith.constant 0 : index
    %c0_15 = arith.constant 0 : index
    %50 = vector.load %arg7[%c0_14, %c0_15] : memref<8x1xf32, #tpu.memory_space<vmem>>, vector<8x1xf32>
    %c0_16 = arith.constant 0 : index
    %c0_17 = arith.constant 0 : index
    %51 = vector.load %arg8[%c0_16, %c0_17] : memref<32x8xbf16, #tpu.memory_space<vmem>>, vector<32x8xbf16>
    %c0_18 = arith.constant 0 : index
    %c0_19 = arith.constant 0 : index
    %52 = vector.load %arg9[%c0_18, %c0_19] : memref<32x1xf32, #tpu.memory_space<vmem>>, vector<32x1xf32>
    %c0_20 = arith.constant 0 : index
    %c0_21 = arith.constant 0 : index
    %c0_22 = arith.constant 0 : index
    %53 = vector.load %arg1[%c0_20, %c0_21, %c0_22] : memref<2x32x256xf32, #tpu.memory_space<vmem>>, vector<1x32x256xf32>
    %54 = vector.shape_cast %53 : vector<1x32x256xf32> to vector<32x256xf32>
    %55 = arith.truncf %54 : vector<32x256xf32> to vector<32x256xbf16>
    %cst = arith.constant dense<0.000000e+00> : vector<8x256xf32>
    %56 = tpu.matmul %45, %55, %cst {dimension_numbers = #tpu.dot_dimension_numbers<[1], [0], [0], [1], [0, 0, 1, 1], [], []>} : vector<8x32xbf16>, vector<32x256xbf16>, vector<8x256xf32> -> vector<8x256xf32>
    %57 = vector.broadcast %46 : vector<8x1xf32> to vector<8x256xf32>
    %58 = arith.addf %56, %57 : vector<8x256xf32>
    %cst_23 = arith.constant 5.000000e-01 : f32
    %59 = vector.broadcast %cst_23 : f32 to vector<8x256xf32>
    %60 = arith.mulf %59, %58 : vector<8x256xf32>
    %cst_24 = arith.constant 4.471500e-02 : f32
    %61 = vector.broadcast %cst_24 : f32 to vector<8x256xf32>
    %62 = arith.mulf %61, %58 : vector<8x256xf32>
    %63 = arith.mulf %62, %58 : vector<8x256xf32>
    %64 = arith.mulf %63, %58 : vector<8x256xf32>
    %65 = arith.addf %58, %64 : vector<8x256xf32>
    %cst_25 = arith.constant 0.797884583 : f32
    %66 = vector.broadcast %cst_25 : f32 to vector<8x256xf32>
    %67 = arith.mulf %66, %65 : vector<8x256xf32>
    %68 = math.tanh %67 : vector<8x256xf32>
    %cst_26 = arith.constant 1.000000e+00 : f32
    %69 = vector.broadcast %cst_26 : f32 to vector<8x256xf32>
    %70 = arith.addf %69, %68 : vector<8x256xf32>
    %71 = arith.mulf %60, %70 : vector<8x256xf32>
    %c17_i32 = arith.constant 17 : i32
    %72 = tpu.dynamic_rotate %71 by %c17_i32 dim 1 : vector<8x256xf32>, i32 -> vector<8x256xf32>
    %73 = vector.broadcast %27 : vector<1x256xf32> to vector<8x256xf32>
    %74 = arith.mulf %72, %73 : vector<8x256xf32>
    %c16_i32_27 = arith.constant 16 : i32
    %75 = tpu.dynamic_rotate %71 by %c16_i32_27 dim 1 : vector<8x256xf32>, i32 -> vector<8x256xf32>
    %76 = vector.broadcast %29 : vector<1x256xf32> to vector<8x256xf32>
    %77 = arith.mulf %75, %76 : vector<8x256xf32>
    %c15_i32 = arith.constant 15 : i32
    %78 = tpu.dynamic_rotate %71 by %c15_i32 dim 1 : vector<8x256xf32>, i32 -> vector<8x256xf32>
    %79 = vector.broadcast %32 : vector<1x256xf32> to vector<8x256xf32>
    %80 = arith.mulf %78, %79 : vector<8x256xf32>
    %c1_i32_28 = arith.constant 1 : i32
    %81 = tpu.dynamic_rotate %71 by %c1_i32_28 dim 1 : vector<8x256xf32>, i32 -> vector<8x256xf32>
    %82 = vector.broadcast %34 : vector<1x256xf32> to vector<8x256xf32>
    %83 = arith.mulf %81, %82 : vector<8x256xf32>
    %c255_i32 = arith.constant 255 : i32
    %84 = tpu.dynamic_rotate %71 by %c255_i32 dim 1 : vector<8x256xf32>, i32 -> vector<8x256xf32>
    %85 = vector.broadcast %36 : vector<1x256xf32> to vector<8x256xf32>
    %86 = arith.mulf %84, %85 : vector<8x256xf32>
    %c241_i32 = arith.constant 241 : i32
    %87 = tpu.dynamic_rotate %71 by %c241_i32 dim 1 : vector<8x256xf32>, i32 -> vector<8x256xf32>
    %88 = vector.broadcast %39 : vector<1x256xf32> to vector<8x256xf32>
    %89 = arith.mulf %87, %88 : vector<8x256xf32>
    %c240_i32_29 = arith.constant 240 : i32
    %90 = tpu.dynamic_rotate %71 by %c240_i32_29 dim 1 : vector<8x256xf32>, i32 -> vector<8x256xf32>
    %91 = vector.broadcast %41 : vector<1x256xf32> to vector<8x256xf32>
    %92 = arith.mulf %90, %91 : vector<8x256xf32>
    %c239_i32 = arith.constant 239 : i32
    %93 = tpu.dynamic_rotate %71 by %c239_i32 dim 1 : vector<8x256xf32>, i32 -> vector<8x256xf32>
    %94 = vector.broadcast %44 : vector<1x256xf32> to vector<8x256xf32>
    %95 = arith.mulf %93, %94 : vector<8x256xf32>
    %96 = tpu.concatenate %74, %77, %80, %83, %71, %86, %89, %92, %95 in 0 : vector<8x256xf32>, vector<8x256xf32>, vector<8x256xf32>, vector<8x256xf32>, vector<8x256xf32>, vector<8x256xf32>, vector<8x256xf32>, vector<8x256xf32>, vector<8x256xf32> -> vector<72x256xf32>
    %97 = arith.truncf %96 : vector<72x256xf32> to vector<72x256xbf16>
    %cst_30 = arith.constant dense<0.000000e+00> : vector<8x256xf32>
    %98 = tpu.matmul %47, %97, %cst_30 {dimension_numbers = #tpu.dot_dimension_numbers<[1], [0], [0], [1], [0, 0, 1, 1], [], []>} : vector<8x72xbf16>, vector<72x256xbf16>, vector<8x256xf32> -> vector<8x256xf32>
    %99 = vector.broadcast %48 : vector<8x1xf32> to vector<8x256xf32>
    %100 = arith.addf %98, %99 : vector<8x256xf32>
    %cst_31 = arith.constant 5.000000e-01 : f32
    %101 = vector.broadcast %cst_31 : f32 to vector<8x256xf32>
    %102 = arith.mulf %101, %100 : vector<8x256xf32>
    %cst_32 = arith.constant 4.471500e-02 : f32
    %103 = vector.broadcast %cst_32 : f32 to vector<8x256xf32>
    %104 = arith.mulf %103, %100 : vector<8x256xf32>
    %105 = arith.mulf %104, %100 : vector<8x256xf32>
    %106 = arith.mulf %105, %100 : vector<8x256xf32>
    %107 = arith.addf %100, %106 : vector<8x256xf32>
    %cst_33 = arith.constant 0.797884583 : f32
    %108 = vector.broadcast %cst_33 : f32 to vector<8x256xf32>
    %109 = arith.mulf %108, %107 : vector<8x256xf32>
    %110 = math.tanh %109 : vector<8x256xf32>
    %cst_34 = arith.constant 1.000000e+00 : f32
    %111 = vector.broadcast %cst_34 : f32 to vector<8x256xf32>
    %112 = arith.addf %111, %110 : vector<8x256xf32>
    %113 = arith.mulf %102, %112 : vector<8x256xf32>
    %c17_i32_35 = arith.constant 17 : i32
    %114 = tpu.dynamic_rotate %113 by %c17_i32_35 dim 1 : vector<8x256xf32>, i32 -> vector<8x256xf32>
    %115 = vector.broadcast %27 : vector<1x256xf32> to vector<8x256xf32>
    %116 = arith.mulf %114, %115 : vector<8x256xf32>
    %c16_i32_36 = arith.constant 16 : i32
    %117 = tpu.dynamic_rotate %113 by %c16_i32_36 dim 1 : vector<8x256xf32>, i32 -> vector<8x256xf32>
    %118 = vector.broadcast %29 : vector<1x256xf32> to vector<8x256xf32>
    %119 = arith.mulf %117, %118 : vector<8x256xf32>
    %c15_i32_37 = arith.constant 15 : i32
    %120 = tpu.dynamic_rotate %113 by %c15_i32_37 dim 1 : vector<8x256xf32>, i32 -> vector<8x256xf32>
    %121 = vector.broadcast %32 : vector<1x256xf32> to vector<8x256xf32>
    %122 = arith.mulf %120, %121 : vector<8x256xf32>
    %c1_i32_38 = arith.constant 1 : i32
    %123 = tpu.dynamic_rotate %113 by %c1_i32_38 dim 1 : vector<8x256xf32>, i32 -> vector<8x256xf32>
    %124 = vector.broadcast %34 : vector<1x256xf32> to vector<8x256xf32>
    %125 = arith.mulf %123, %124 : vector<8x256xf32>
    %c255_i32_39 = arith.constant 255 : i32
    %126 = tpu.dynamic_rotate %113 by %c255_i32_39 dim 1 : vector<8x256xf32>, i32 -> vector<8x256xf32>
    %127 = vector.broadcast %36 : vector<1x256xf32> to vector<8x256xf32>
    %128 = arith.mulf %126, %127 : vector<8x256xf32>
    %c241_i32_40 = arith.constant 241 : i32
    %129 = tpu.dynamic_rotate %113 by %c241_i32_40 dim 1 : vector<8x256xf32>, i32 -> vector<8x256xf32>
    %130 = vector.broadcast %39 : vector<1x256xf32> to vector<8x256xf32>
    %131 = arith.mulf %129, %130 : vector<8x256xf32>
    %c240_i32_41 = arith.constant 240 : i32
    %132 = tpu.dynamic_rotate %113 by %c240_i32_41 dim 1 : vector<8x256xf32>, i32 -> vector<8x256xf32>
    %133 = vector.broadcast %41 : vector<1x256xf32> to vector<8x256xf32>
    %134 = arith.mulf %132, %133 : vector<8x256xf32>
    %c239_i32_42 = arith.constant 239 : i32
    %135 = tpu.dynamic_rotate %113 by %c239_i32_42 dim 1 : vector<8x256xf32>, i32 -> vector<8x256xf32>
    %136 = vector.broadcast %44 : vector<1x256xf32> to vector<8x256xf32>
    %137 = arith.mulf %135, %136 : vector<8x256xf32>
    %138 = tpu.concatenate %116, %119, %122, %125, %113, %128, %131, %134, %137 in 0 : vector<8x256xf32>, vector<8x256xf32>, vector<8x256xf32>, vector<8x256xf32>, vector<8x256xf32>, vector<8x256xf32>, vector<8x256xf32>, vector<8x256xf32>, vector<8x256xf32> -> vector<72x256xf32>
    %139 = arith.truncf %138 : vector<72x256xf32> to vector<72x256xbf16>
    %cst_43 = arith.constant dense<0.000000e+00> : vector<8x256xf32>
    %140 = tpu.matmul %49, %139, %cst_43 {dimension_numbers = #tpu.dot_dimension_numbers<[1], [0], [0], [1], [0, 0, 1, 1], [], []>} : vector<8x72xbf16>, vector<72x256xbf16>, vector<8x256xf32> -> vector<8x256xf32>
    %141 = vector.broadcast %50 : vector<8x1xf32> to vector<8x256xf32>
    %142 = arith.addf %140, %141 : vector<8x256xf32>
    %cst_44 = arith.constant 5.000000e-01 : f32
    %143 = vector.broadcast %cst_44 : f32 to vector<8x256xf32>
    %144 = arith.mulf %143, %142 : vector<8x256xf32>
    %cst_45 = arith.constant 4.471500e-02 : f32
    %145 = vector.broadcast %cst_45 : f32 to vector<8x256xf32>
    %146 = arith.mulf %145, %142 : vector<8x256xf32>
    %147 = arith.mulf %146, %142 : vector<8x256xf32>
    %148 = arith.mulf %147, %142 : vector<8x256xf32>
    %149 = arith.addf %142, %148 : vector<8x256xf32>
    %cst_46 = arith.constant 0.797884583 : f32
    %150 = vector.broadcast %cst_46 : f32 to vector<8x256xf32>
    %151 = arith.mulf %150, %149 : vector<8x256xf32>
    %152 = math.tanh %151 : vector<8x256xf32>
    %cst_47 = arith.constant 1.000000e+00 : f32
    %153 = vector.broadcast %cst_47 : f32 to vector<8x256xf32>
    %154 = arith.addf %153, %152 : vector<8x256xf32>
    %155 = arith.mulf %144, %154 : vector<8x256xf32>
    %156 = arith.truncf %155 : vector<8x256xf32> to vector<8x256xbf16>
    %cst_48 = arith.constant dense<0.000000e+00> : vector<32x256xf32>
    %157 = tpu.matmul %51, %156, %cst_48 {dimension_numbers = #tpu.dot_dimension_numbers<[1], [0], [0], [1], [0, 0, 1, 1], [], []>} : vector<32x8xbf16>, vector<8x256xbf16>, vector<32x256xf32> -> vector<32x256xf32>
    %158 = vector.broadcast %52 : vector<32x1xf32> to vector<32x256xf32>
    %159 = arith.addf %157, %158 : vector<32x256xf32>
    %160 = arith.addf %159, %54 : vector<32x256xf32>
    %161 = arith.truncf %160 : vector<32x256xf32> to vector<32x256xbf16>
    %c0_49 = arith.constant 0 : index
    %c0_50 = arith.constant 0 : index
    %c0_51 = arith.constant 0 : index
    %162 = vector.load %arg10[%c0_49, %c0_50, %c0_51] : memref<2x32x256xbf16, #tpu.memory_space<vmem>>, vector<1x32x256xbf16>
    %163 = vector.shape_cast %162 : vector<1x32x256xbf16> to vector<32x256xbf16>
    %164 = vector.shape_cast %161 : vector<32x256xbf16> to vector<1x32x256xbf16>
    tpu.vector_store %arg10[%c0_49, %c0_50, %c0_51], %164 {strides = array<i32>} : memref<2x32x256xbf16, #tpu.memory_space<vmem>>, vector<1x32x256xbf16>,
    %cst_52 = arith.constant dense<0.000000e+00> : vector<32xf32>
    %165 = vector.multi_reduction <add>, %160, %cst_52 [1] : vector<32x256xf32> to vector<32xf32>
    %166 = vector.shape_cast %165 : vector<32xf32> to vector<32x1xf32>
    %167 = arith.mulf %160, %160 : vector<32x256xf32>
    %cst_53 = arith.constant dense<0.000000e+00> : vector<32xf32>
    %168 = vector.multi_reduction <add>, %167, %cst_53 [1] : vector<32x256xf32> to vector<32xf32>
    %169 = vector.shape_cast %168 : vector<32xf32> to vector<32x1xf32>
    %170 = tpu.concatenate %166, %169 in 1 : vector<32x1xf32>, vector<32x1xf32> -> vector<32x2xf32>
    %c0_54 = arith.constant 0 : index
    %c0_55 = arith.constant 0 : index
    %c0_56 = arith.constant 0 : index
    %171 = vector.load %arg11[%c0_54, %c0_55, %c0_56] : memref<2x32x2xf32, #tpu.memory_space<vmem>>, vector<1x32x2xf32>
    %172 = vector.shape_cast %171 : vector<1x32x2xf32> to vector<32x2xf32>
    %173 = vector.shape_cast %170 : vector<32x2xf32> to vector<1x32x2xf32>
    tpu.vector_store %arg11[%c0_54, %c0_55, %c0_56], %173 {strides = array<i32>} : memref<2x32x2xf32, #tpu.memory_space<vmem>>, vector<1x32x2xf32>,
    %c1 = arith.constant 1 : index
    %c0_57 = arith.constant 0 : index
    %c0_58 = arith.constant 0 : index
    %174 = vector.load %arg1[%c1, %c0_57, %c0_58] : memref<2x32x256xf32, #tpu.memory_space<vmem>>, vector<1x32x256xf32>
    %175 = vector.shape_cast %174 : vector<1x32x256xf32> to vector<32x256xf32>
    %176 = arith.truncf %175 : vector<32x256xf32> to vector<32x256xbf16>
    %cst_59 = arith.constant dense<0.000000e+00> : vector<8x256xf32>
    %177 = tpu.matmul %45, %176, %cst_59 {dimension_numbers = #tpu.dot_dimension_numbers<[1], [0], [0], [1], [0, 0, 1, 1], [], []>} : vector<8x32xbf16>, vector<32x256xbf16>, vector<8x256xf32> -> vector<8x256xf32>
    %178 = vector.broadcast %46 : vector<8x1xf32> to vector<8x256xf32>
    %179 = arith.addf %177, %178 : vector<8x256xf32>
    %cst_60 = arith.constant 5.000000e-01 : f32
    %180 = vector.broadcast %cst_60 : f32 to vector<8x256xf32>
    %181 = arith.mulf %180, %179 : vector<8x256xf32>
    %cst_61 = arith.constant 4.471500e-02 : f32
    %182 = vector.broadcast %cst_61 : f32 to vector<8x256xf32>
    %183 = arith.mulf %182, %179 : vector<8x256xf32>
    %184 = arith.mulf %183, %179 : vector<8x256xf32>
    %185 = arith.mulf %184, %179 : vector<8x256xf32>
    %186 = arith.addf %179, %185 : vector<8x256xf32>
    %cst_62 = arith.constant 0.797884583 : f32
    %187 = vector.broadcast %cst_62 : f32 to vector<8x256xf32>
    %188 = arith.mulf %187, %186 : vector<8x256xf32>
    %189 = math.tanh %188 : vector<8x256xf32>
    %cst_63 = arith.constant 1.000000e+00 : f32
    %190 = vector.broadcast %cst_63 : f32 to vector<8x256xf32>
    %191 = arith.addf %190, %189 : vector<8x256xf32>
    %192 = arith.mulf %181, %191 : vector<8x256xf32>
    %c17_i32_64 = arith.constant 17 : i32
    %193 = tpu.dynamic_rotate %192 by %c17_i32_64 dim 1 : vector<8x256xf32>, i32 -> vector<8x256xf32>
    %194 = vector.broadcast %27 : vector<1x256xf32> to vector<8x256xf32>
    %195 = arith.mulf %193, %194 : vector<8x256xf32>
    %c16_i32_65 = arith.constant 16 : i32
    %196 = tpu.dynamic_rotate %192 by %c16_i32_65 dim 1 : vector<8x256xf32>, i32 -> vector<8x256xf32>
    %197 = vector.broadcast %29 : vector<1x256xf32> to vector<8x256xf32>
    %198 = arith.mulf %196, %197 : vector<8x256xf32>
    %c15_i32_66 = arith.constant 15 : i32
    %199 = tpu.dynamic_rotate %192 by %c15_i32_66 dim 1 : vector<8x256xf32>, i32 -> vector<8x256xf32>
    %200 = vector.broadcast %32 : vector<1x256xf32> to vector<8x256xf32>
    %201 = arith.mulf %199, %200 : vector<8x256xf32>
    %c1_i32_67 = arith.constant 1 : i32
    %202 = tpu.dynamic_rotate %192 by %c1_i32_67 dim 1 : vector<8x256xf32>, i32 -> vector<8x256xf32>
    %203 = vector.broadcast %34 : vector<1x256xf32> to vector<8x256xf32>
    %204 = arith.mulf %202, %203 : vector<8x256xf32>
    %c255_i32_68 = arith.constant 255 : i32
    %205 = tpu.dynamic_rotate %192 by %c255_i32_68 dim 1 : vector<8x256xf32>, i32 -> vector<8x256xf32>
    %206 = vector.broadcast %36 : vector<1x256xf32> to vector<8x256xf32>
    %207 = arith.mulf %205, %206 : vector<8x256xf32>
    %c241_i32_69 = arith.constant 241 : i32
    %208 = tpu.dynamic_rotate %192 by %c241_i32_69 dim 1 : vector<8x256xf32>, i32 -> vector<8x256xf32>
    %209 = vector.broadcast %39 : vector<1x256xf32> to vector<8x256xf32>
    %210 = arith.mulf %208, %209 : vector<8x256xf32>
    %c240_i32_70 = arith.constant 240 : i32
    %211 = tpu.dynamic_rotate %192 by %c240_i32_70 dim 1 : vector<8x256xf32>, i32 -> vector<8x256xf32>
    %212 = vector.broadcast %41 : vector<1x256xf32> to vector<8x256xf32>
    %213 = arith.mulf %211, %212 : vector<8x256xf32>
    %c239_i32_71 = arith.constant 239 : i32
    %214 = tpu.dynamic_rotate %192 by %c239_i32_71 dim 1 : vector<8x256xf32>, i32 -> vector<8x256xf32>
    %215 = vector.broadcast %44 : vector<1x256xf32> to vector<8x256xf32>
    %216 = arith.mulf %214, %215 : vector<8x256xf32>
    %217 = tpu.concatenate %195, %198, %201, %204, %192, %207, %210, %213, %216 in 0 : vector<8x256xf32>, vector<8x256xf32>, vector<8x256xf32>, vector<8x256xf32>, vector<8x256xf32>, vector<8x256xf32>, vector<8x256xf32>, vector<8x256xf32>, vector<8x256xf32> -> vector<72x256xf32>
    %218 = arith.truncf %217 : vector<72x256xf32> to vector<72x256xbf16>
    %cst_72 = arith.constant dense<0.000000e+00> : vector<8x256xf32>
    %219 = tpu.matmul %47, %218, %cst_72 {dimension_numbers = #tpu.dot_dimension_numbers<[1], [0], [0], [1], [0, 0, 1, 1], [], []>} : vector<8x72xbf16>, vector<72x256xbf16>, vector<8x256xf32> -> vector<8x256xf32>
    %220 = vector.broadcast %48 : vector<8x1xf32> to vector<8x256xf32>
    %221 = arith.addf %219, %220 : vector<8x256xf32>
    %cst_73 = arith.constant 5.000000e-01 : f32
    %222 = vector.broadcast %cst_73 : f32 to vector<8x256xf32>
    %223 = arith.mulf %222, %221 : vector<8x256xf32>
    %cst_74 = arith.constant 4.471500e-02 : f32
    %224 = vector.broadcast %cst_74 : f32 to vector<8x256xf32>
    %225 = arith.mulf %224, %221 : vector<8x256xf32>
    %226 = arith.mulf %225, %221 : vector<8x256xf32>
    %227 = arith.mulf %226, %221 : vector<8x256xf32>
    %228 = arith.addf %221, %227 : vector<8x256xf32>
    %cst_75 = arith.constant 0.797884583 : f32
    %229 = vector.broadcast %cst_75 : f32 to vector<8x256xf32>
    %230 = arith.mulf %229, %228 : vector<8x256xf32>
    %231 = math.tanh %230 : vector<8x256xf32>
    %cst_76 = arith.constant 1.000000e+00 : f32
    %232 = vector.broadcast %cst_76 : f32 to vector<8x256xf32>
    %233 = arith.addf %232, %231 : vector<8x256xf32>
    %234 = arith.mulf %223, %233 : vector<8x256xf32>
    %c17_i32_77 = arith.constant 17 : i32
    %235 = tpu.dynamic_rotate %234 by %c17_i32_77 dim 1 : vector<8x256xf32>, i32 -> vector<8x256xf32>
    %236 = vector.broadcast %27 : vector<1x256xf32> to vector<8x256xf32>
    %237 = arith.mulf %235, %236 : vector<8x256xf32>
    %c16_i32_78 = arith.constant 16 : i32
    %238 = tpu.dynamic_rotate %234 by %c16_i32_78 dim 1 : vector<8x256xf32>, i32 -> vector<8x256xf32>
    %239 = vector.broadcast %29 : vector<1x256xf32> to vector<8x256xf32>
    %240 = arith.mulf %238, %239 : vector<8x256xf32>
    %c15_i32_79 = arith.constant 15 : i32
    %241 = tpu.dynamic_rotate %234 by %c15_i32_79 dim 1 : vector<8x256xf32>, i32 -> vector<8x256xf32>
    %242 = vector.broadcast %32 : vector<1x256xf32> to vector<8x256xf32>
    %243 = arith.mulf %241, %242 : vector<8x256xf32>
    %c1_i32_80 = arith.constant 1 : i32
    %244 = tpu.dynamic_rotate %234 by %c1_i32_80 dim 1 : vector<8x256xf32>, i32 -> vector<8x256xf32>
    %245 = vector.broadcast %34 : vector<1x256xf32> to vector<8x256xf32>
    %246 = arith.mulf %244, %245 : vector<8x256xf32>
    %c255_i32_81 = arith.constant 255 : i32
    %247 = tpu.dynamic_rotate %234 by %c255_i32_81 dim 1 : vector<8x256xf32>, i32 -> vector<8x256xf32>
    %248 = vector.broadcast %36 : vector<1x256xf32> to vector<8x256xf32>
    %249 = arith.mulf %247, %248 : vector<8x256xf32>
    %c241_i32_82 = arith.constant 241 : i32
    %250 = tpu.dynamic_rotate %234 by %c241_i32_82 dim 1 : vector<8x256xf32>, i32 -> vector<8x256xf32>
    %251 = vector.broadcast %39 : vector<1x256xf32> to vector<8x256xf32>
    %252 = arith.mulf %250, %251 : vector<8x256xf32>
    %c240_i32_83 = arith.constant 240 : i32
    %253 = tpu.dynamic_rotate %234 by %c240_i32_83 dim 1 : vector<8x256xf32>, i32 -> vector<8x256xf32>
    %254 = vector.broadcast %41 : vector<1x256xf32> to vector<8x256xf32>
    %255 = arith.mulf %253, %254 : vector<8x256xf32>
    %c239_i32_84 = arith.constant 239 : i32
    %256 = tpu.dynamic_rotate %234 by %c239_i32_84 dim 1 : vector<8x256xf32>, i32 -> vector<8x256xf32>
    %257 = vector.broadcast %44 : vector<1x256xf32> to vector<8x256xf32>
    %258 = arith.mulf %256, %257 : vector<8x256xf32>
    %259 = tpu.concatenate %237, %240, %243, %246, %234, %249, %252, %255, %258 in 0 : vector<8x256xf32>, vector<8x256xf32>, vector<8x256xf32>, vector<8x256xf32>, vector<8x256xf32>, vector<8x256xf32>, vector<8x256xf32>, vector<8x256xf32>, vector<8x256xf32> -> vector<72x256xf32>
    %260 = arith.truncf %259 : vector<72x256xf32> to vector<72x256xbf16>
    %cst_85 = arith.constant dense<0.000000e+00> : vector<8x256xf32>
    %261 = tpu.matmul %49, %260, %cst_85 {dimension_numbers = #tpu.dot_dimension_numbers<[1], [0], [0], [1], [0, 0, 1, 1], [], []>} : vector<8x72xbf16>, vector<72x256xbf16>, vector<8x256xf32> -> vector<8x256xf32>
    %262 = vector.broadcast %50 : vector<8x1xf32> to vector<8x256xf32>
    %263 = arith.addf %261, %262 : vector<8x256xf32>
    %cst_86 = arith.constant 5.000000e-01 : f32
    %264 = vector.broadcast %cst_86 : f32 to vector<8x256xf32>
    %265 = arith.mulf %264, %263 : vector<8x256xf32>
    %cst_87 = arith.constant 4.471500e-02 : f32
    %266 = vector.broadcast %cst_87 : f32 to vector<8x256xf32>
    %267 = arith.mulf %266, %263 : vector<8x256xf32>
    %268 = arith.mulf %267, %263 : vector<8x256xf32>
    %269 = arith.mulf %268, %263 : vector<8x256xf32>
    %270 = arith.addf %263, %269 : vector<8x256xf32>
    %cst_88 = arith.constant 0.797884583 : f32
    %271 = vector.broadcast %cst_88 : f32 to vector<8x256xf32>
    %272 = arith.mulf %271, %270 : vector<8x256xf32>
    %273 = math.tanh %272 : vector<8x256xf32>
    %cst_89 = arith.constant 1.000000e+00 : f32
    %274 = vector.broadcast %cst_89 : f32 to vector<8x256xf32>
    %275 = arith.addf %274, %273 : vector<8x256xf32>
    %276 = arith.mulf %265, %275 : vector<8x256xf32>
    %277 = arith.truncf %276 : vector<8x256xf32> to vector<8x256xbf16>
    %cst_90 = arith.constant dense<0.000000e+00> : vector<32x256xf32>
    %278 = tpu.matmul %51, %277, %cst_90 {dimension_numbers = #tpu.dot_dimension_numbers<[1], [0], [0], [1], [0, 0, 1, 1], [], []>} : vector<32x8xbf16>, vector<8x256xbf16>, vector<32x256xf32> -> vector<32x256xf32>
    %279 = vector.broadcast %52 : vector<32x1xf32> to vector<32x256xf32>
    %280 = arith.addf %278, %279 : vector<32x256xf32>
    %281 = arith.addf %280, %175 : vector<32x256xf32>
    %282 = arith.truncf %281 : vector<32x256xf32> to vector<32x256xbf16>
    %c1_91 = arith.constant 1 : index
    %c0_92 = arith.constant 0 : index
    %c0_93 = arith.constant 0 : index
    %283 = vector.load %arg10[%c1_91, %c0_92, %c0_93] : memref<2x32x256xbf16, #tpu.memory_space<vmem>>, vector<1x32x256xbf16>
    %284 = vector.shape_cast %283 : vector<1x32x256xbf16> to vector<32x256xbf16>
    %285 = vector.shape_cast %282 : vector<32x256xbf16> to vector<1x32x256xbf16>
    tpu.vector_store %arg10[%c1_91, %c0_92, %c0_93], %285 {strides = array<i32>} : memref<2x32x256xbf16, #tpu.memory_space<vmem>>, vector<1x32x256xbf16>,
    %cst_94 = arith.constant dense<0.000000e+00> : vector<32xf32>
    %286 = vector.multi_reduction <add>, %281, %cst_94 [1] : vector<32x256xf32> to vector<32xf32>
    %287 = vector.shape_cast %286 : vector<32xf32> to vector<32x1xf32>
    %288 = arith.mulf %281, %281 : vector<32x256xf32>
    %cst_95 = arith.constant dense<0.000000e+00> : vector<32xf32>
    %289 = vector.multi_reduction <add>, %288, %cst_95 [1] : vector<32x256xf32> to vector<32xf32>
    %290 = vector.shape_cast %289 : vector<32xf32> to vector<32x1xf32>
    %291 = tpu.concatenate %287, %290 in 1 : vector<32x1xf32>, vector<32x1xf32> -> vector<32x2xf32>
    %c1_96 = arith.constant 1 : index
    %c0_97 = arith.constant 0 : index
    %c0_98 = arith.constant 0 : index
    %292 = vector.load %arg11[%c1_96, %c0_97, %c0_98] : memref<2x32x2xf32, #tpu.memory_space<vmem>>, vector<1x32x2xf32>
    %293 = vector.shape_cast %292 : vector<1x32x2xf32> to vector<32x2xf32>
    %294 = vector.shape_cast %291 : vector<32x2xf32> to vector<1x32x2xf32>
    tpu.vector_store %arg11[%c1_96, %c0_97, %c0_98], %294 {strides = array<i32>} : memref<2x32x2xf32, #tpu.memory_space<vmem>>, vector<1x32x2xf32>,
    return
  }
  func.func @transform_0(%arg0: i32) -> (i32, i32, i32) {
    %c0_i32 = arith.constant 0 : i32
    %c0_i32_0 = arith.constant 0 : i32
    %c0_i32_1 = arith.constant 0 : i32
    return %arg0, %c0_i32, %c0_i32_0 : i32, i32, i32
  }
  func.func @transform_1(%arg0: i32) -> (i32, i32) {
    %c0_i32 = arith.constant 0 : i32
    %c0_i32_0 = arith.constant 0 : i32
    %c0_i32_1 = arith.constant 0 : i32
    return %c0_i32, %c0_i32_0 : i32, i32
  }
  func.func @transform_2(%arg0: i32) -> (i32, i32) {
    %c0_i32 = arith.constant 0 : i32
    %c0_i32_0 = arith.constant 0 : i32
    %c0_i32_1 = arith.constant 0 : i32
    return %c0_i32, %c0_i32_0 : i32, i32
  }
  func.func @transform_3(%arg0: i32) -> (i32, i32) {
    %c0_i32 = arith.constant 0 : i32
    %c0_i32_0 = arith.constant 0 : i32
    %c0_i32_1 = arith.constant 0 : i32
    return %c0_i32, %c0_i32_0 : i32, i32
  }
  func.func @transform_4(%arg0: i32) -> (i32, i32) {
    %c0_i32 = arith.constant 0 : i32
    %c0_i32_0 = arith.constant 0 : i32
    %c0_i32_1 = arith.constant 0 : i32
    return %c0_i32, %c0_i32_0 : i32, i32
  }
  func.func @transform_5(%arg0: i32) -> (i32, i32) {
    %c0_i32 = arith.constant 0 : i32
    %c0_i32_0 = arith.constant 0 : i32
    %c0_i32_1 = arith.constant 0 : i32
    return %c0_i32, %c0_i32_0 : i32, i32
  }
  func.func @transform_6(%arg0: i32) -> (i32, i32) {
    %c0_i32 = arith.constant 0 : i32
    %c0_i32_0 = arith.constant 0 : i32
    %c0_i32_1 = arith.constant 0 : i32
    return %c0_i32, %c0_i32_0 : i32, i32
  }
  func.func @transform_7(%arg0: i32) -> (i32, i32) {
    %c0_i32 = arith.constant 0 : i32
    %c0_i32_0 = arith.constant 0 : i32
    %c0_i32_1 = arith.constant 0 : i32
    return %c0_i32, %c0_i32_0 : i32, i32
  }
  func.func @transform_8(%arg0: i32) -> (i32, i32) {
    %c0_i32 = arith.constant 0 : i32
    %c0_i32_0 = arith.constant 0 : i32
    %c0_i32_1 = arith.constant 0 : i32
    return %c0_i32, %c0_i32_0 : i32, i32
  }
  func.func @transform_9(%arg0: i32) -> (i32, i32, i32) {
    %c0_i32 = arith.constant 0 : i32
    %c0_i32_0 = arith.constant 0 : i32
    %c0_i32_1 = arith.constant 0 : i32
    return %arg0, %c0_i32, %c0_i32_0 : i32, i32, i32
  }
  func.func @transform_10(%arg0: i32) -> (i32, i32, i32) {
    %c0_i32 = arith.constant 0 : i32
    %c0_i32_0 = arith.constant 0 : i32
    %c0_i32_1 = arith.constant 0 : i32
    return %arg0, %c0_i32, %c0_i32_0 : i32, i32, i32
  }
}

module attributes {stable_mosaic.version = 11 : i64} {
  func.func @_bn_gelu_kernel(%arg0: i32, %arg1: memref<2x32x256xbf16, #tpu.memory_space<vmem>>, %arg2: memref<1x32x1xf32, #tpu.memory_space<vmem>>, %arg3: memref<1x32x1xf32, #tpu.memory_space<vmem>>, %arg4: memref<2x32x256xf32, #tpu.memory_space<vmem>>) attributes {dimension_semantics = [#tpu.dimension_semantics<parallel>], iteration_bounds = array<i64: 1>, scalar_prefetch = 0 : i64, scratch_operands = 0 : i64, tpu.core_type = #tpu.core_type<tc>, window_params = [{transform_indices = @transform_0, window_bounds = array<i64: 2, 32, 256>}, {pipeline_mode = #tpu.pipeline_mode<synchronous>, transform_indices = @transform_1, window_bounds = array<i64: 1, 32, 1>}, {pipeline_mode = #tpu.pipeline_mode<synchronous>, transform_indices = @transform_2, window_bounds = array<i64: 1, 32, 1>}, {transform_indices = @transform_3, window_bounds = array<i64: 2, 32, 256>}]} {
    %c0 = arith.constant 0 : index
    %c0_0 = arith.constant 0 : index
    %c0_1 = arith.constant 0 : index
    %0 = vector.load %arg1[%c0, %c0_0, %c0_1] : memref<2x32x256xbf16, #tpu.memory_space<vmem>>, vector<2x32x256xbf16>
    %1 = arith.extf %0 : vector<2x32x256xbf16> to vector<2x32x256xf32>
    %c0_2 = arith.constant 0 : index
    %c0_3 = arith.constant 0 : index
    %c0_4 = arith.constant 0 : index
    %2 = vector.load %arg2[%c0_2, %c0_3, %c0_4] : memref<1x32x1xf32, #tpu.memory_space<vmem>>, vector<1x32x1xf32>
    %3 = vector.broadcast %2 : vector<1x32x1xf32> to vector<2x32x256xf32>
    %4 = arith.mulf %1, %3 : vector<2x32x256xf32>
    %c0_5 = arith.constant 0 : index
    %c0_6 = arith.constant 0 : index
    %c0_7 = arith.constant 0 : index
    %5 = vector.load %arg3[%c0_5, %c0_6, %c0_7] : memref<1x32x1xf32, #tpu.memory_space<vmem>>, vector<1x32x1xf32>
    %6 = vector.broadcast %5 : vector<1x32x1xf32> to vector<2x32x256xf32>
    %7 = arith.addf %4, %6 : vector<2x32x256xf32>
    %cst = arith.constant 5.000000e-01 : f32
    %8 = vector.broadcast %cst : f32 to vector<2x32x256xf32>
    %9 = arith.mulf %8, %7 : vector<2x32x256xf32>
    %cst_8 = arith.constant 4.471500e-02 : f32
    %10 = vector.broadcast %cst_8 : f32 to vector<2x32x256xf32>
    %11 = arith.mulf %10, %7 : vector<2x32x256xf32>
    %12 = arith.mulf %11, %7 : vector<2x32x256xf32>
    %13 = arith.mulf %12, %7 : vector<2x32x256xf32>
    %14 = arith.addf %7, %13 : vector<2x32x256xf32>
    %cst_9 = arith.constant 0.797884583 : f32
    %15 = vector.broadcast %cst_9 : f32 to vector<2x32x256xf32>
    %16 = arith.mulf %15, %14 : vector<2x32x256xf32>
    %17 = math.tanh %16 : vector<2x32x256xf32>
    %cst_10 = arith.constant 1.000000e+00 : f32
    %18 = vector.broadcast %cst_10 : f32 to vector<2x32x256xf32>
    %19 = arith.addf %18, %17 : vector<2x32x256xf32>
    %20 = arith.mulf %9, %19 : vector<2x32x256xf32>
    %c0_11 = arith.constant 0 : index
    %c0_12 = arith.constant 0 : index
    %c0_13 = arith.constant 0 : index
    %21 = vector.load %arg4[%c0_11, %c0_12, %c0_13] : memref<2x32x256xf32, #tpu.memory_space<vmem>>, vector<2x32x256xf32>
    tpu.vector_store %arg4[%c0_11, %c0_12, %c0_13], %20 {strides = array<i32>} : memref<2x32x256xf32, #tpu.memory_space<vmem>>, vector<2x32x256xf32>,
    return
  }
  func.func @transform_0(%arg0: i32) -> (i32, i32, i32) {
    %c0_i32 = arith.constant 0 : i32
    %c0_i32_0 = arith.constant 0 : i32
    %c0_i32_1 = arith.constant 0 : i32
    return %arg0, %c0_i32, %c0_i32_0 : i32, i32, i32
  }
  func.func @transform_1(%arg0: i32) -> (i32, i32, i32) {
    %c0_i32 = arith.constant 0 : i32
    %c0_i32_0 = arith.constant 0 : i32
    %c0_i32_1 = arith.constant 0 : i32
    %c0_i32_2 = arith.constant 0 : i32
    return %c0_i32, %c0_i32_0, %c0_i32_1 : i32, i32, i32
  }
  func.func @transform_2(%arg0: i32) -> (i32, i32, i32) {
    %c0_i32 = arith.constant 0 : i32
    %c0_i32_0 = arith.constant 0 : i32
    %c0_i32_1 = arith.constant 0 : i32
    %c0_i32_2 = arith.constant 0 : i32
    return %c0_i32, %c0_i32_0, %c0_i32_1 : i32, i32, i32
  }
  func.func @transform_3(%arg0: i32) -> (i32, i32, i32) {
    %c0_i32 = arith.constant 0 : i32
    %c0_i32_0 = arith.constant 0 : i32
    %c0_i32_1 = arith.constant 0 : i32
    return %arg0, %c0_i32, %c0_i32_0 : i32, i32, i32
  }
}

</mosaic_0001>

<llo_original>
// kernel: decoding_block_forward.3
$region0: #{decoding_block_forward.3}
  #allocation0 [shape = 'u32[]', space=smem, size = 0x4, offset = 0x4, fixed_abs, tag = 'smem constant byte address 0x4 - core index']
  #allocation1 [shape = 'u32[144,128]{1,0:T(1,128)}', space=vmem, size = 0x12000, scoped, tag = 'internal scratch']
  %s0 = inlined_call_operand.vmem [shape: bf16[2,32,256], index: 0, kind: input, shape index: {}]
  %s1 = inlined_call_operand.vmem [shape: f32[1,32,1], index: 1, kind: input, shape index: {}]
  %s2 = inlined_call_operand.vmem [shape: f32[1,32,1], index: 2, kind: input, shape index: {}]
  %s3 = inlined_call_operand.vmem [shape: f32[2,32,256], index: 3, kind: output, shape index: {}]
  %s4 = sld [smem:[#allocation0]]
  $region22: #{decoding_block_forward.3} parent=0
    _
  %s6 = ssub.s32 1, %s4
  %s7 = scalar_select 0, %s6, %s4
  // Predicated region
  $region2: #{decoding_block_forward.3} parent=0 // pred_check
    _
  $region3: #{decoding_block_forward.3} parent=0 // pred_check_branch
    %9 = sbr.rel (0) target = $region5
  $region4: #{decoding_block_forward.3} parent=0 // pred_region
    _
  $region5: #{decoding_block_forward.3} parent=0 // pred_fallthru
    _
  // Predicated region
  $region6: #{decoding_block_forward.3} parent=0 // pred_check
    _
  $region7: #{decoding_block_forward.3} parent=0 // pred_check_branch
    %11 = sbr.rel (0) target = $region9
  $region8: #{decoding_block_forward.3} parent=0 // pred_region
    _
  $region9: #{decoding_block_forward.3} parent=0 // pred_fallthru
    _
  // Predicated region
  $region10: #{decoding_block_forward.3} parent=0 // pred_check
    _
  $region11: #{decoding_block_forward.3} parent=0 // pred_check_branch
    %13 = sbr.rel (0) target = $region13
  $region12: #{decoding_block_forward.3} parent=0 // pred_region
    _
  $region13: #{decoding_block_forward.3} parent=0 // pred_fallthru
    _
  %v14 = vld [vmem:[%s0] sm:$0xff]
  %v15 = vld [vmem:[%s0 + $0x8] sm:$0xff]
  %v16 = vld [vmem:[%s0 + $0x10] sm:$0xff]
  %v17 = vld [vmem:[%s0 + $0x18] sm:$0xff]
  %v18 = vld [vmem:[%s0 + $0x20] sm:$0xff]
  %v19 = vld [vmem:[%s0 + $0x28] sm:$0xff]
  %v20 = vld [vmem:[%s0 + $0x30] sm:$0xff]
  %v21 = vld [vmem:[%s0 + $0x38] sm:$0xff]
  %v22 = vunpack.c.l.bf16 %v14
  %v23 = vunpack.c.h.bf16 %v14
  %v24 = vunpack.c.l.bf16 %v15
  %v25 = vunpack.c.h.bf16 %v15
  %v26 = vunpack.c.l.bf16 %v16
  %v27 = vunpack.c.h.bf16 %v16
  %v28 = vunpack.c.l.bf16 %v17
  %v29 = vunpack.c.h.bf16 %v17
  %v30 = vunpack.c.l.bf16 %v18
  %v31 = vunpack.c.h.bf16 %v18
  %v32 = vunpack.c.l.bf16 %v19
  %v33 = vunpack.c.h.bf16 %v19
  %v34 = vunpack.c.l.bf16 %v20
  %v35 = vunpack.c.h.bf16 %v20
  %v36 = vunpack.c.l.bf16 %v21
  %v37 = vunpack.c.h.bf16 %v21
  %v38 = vld [vmem:[%s1] sm:$0xff]
  %v39 = vld [vmem:[%s1 + $0x8] sm:$0xff]
  %v40 = vld [vmem:[%s1 + $0x10] sm:$0xff]
  %v41 = vld [vmem:[%s1 + $0x18] sm:$0xff]
  %43 = vset.pattern.permute.xlu0 0
  %44 = vperm.xlu0 %43, %v38
  %v45 = vpop.permute.xlu0 %44
  %48 = vset.pattern.permute.xlu0 0
  %49 = vperm.xlu0 %48, %v39
  %v50 = vpop.permute.xlu0 %49
  %53 = vset.pattern.permute.xlu0 0
  %54 = vperm.xlu0 %53, %v40
  %v55 = vpop.permute.xlu0 %54
  %58 = vset.pattern.permute.xlu0 0
  %59 = vperm.xlu0 %58, %v41
  %v60 = vpop.permute.xlu0 %59
  %v62 = vmul.f32 %v22, %v45
  %v63 = vmul.f32 %v23, %v45
  %v64 = vmul.f32 %v24, %v50
  %v65 = vmul.f32 %v25, %v50
  %v66 = vmul.f32 %v26, %v55
  %v67 = vmul.f32 %v27, %v55
  %v68 = vmul.f32 %v28, %v60
  %v69 = vmul.f32 %v29, %v60
  %v70 = vmul.f32 %v30, %v45
  %v71 = vmul.f32 %v31, %v45
  %v72 = vmul.f32 %v32, %v50
  %v73 = vmul.f32 %v33, %v50
  %v74 = vmul.f32 %v34, %v55
  %v75 = vmul.f32 %v35, %v55
  %v76 = vmul.f32 %v36, %v60
  %v77 = vmul.f32 %v37, %v60
  %v78 = vld [vmem:[%s2] sm:$0xff]
  %v79 = vld [vmem:[%s2 + $0x8] sm:$0xff]
  %v80 = vld [vmem:[%s2 + $0x10] sm:$0xff]
  %v81 = vld [vmem:[%s2 + $0x18] sm:$0xff]
  %83 = vset.pattern.permute.xlu0 0
  %84 = vperm.xlu0 %83, %v78
  %v85 = vpop.permute.xlu0 %84
  %88 = vset.pattern.permute.xlu0 0
  %89 = vperm.xlu0 %88, %v79
  %v90 = vpop.permute.xlu0 %89
  %93 = vset.pattern.permute.xlu0 0
  %94 = vperm.xlu0 %93, %v80
  %v95 = vpop.permute.xlu0 %94
  %98 = vset.pattern.permute.xlu0 0
  %99 = vperm.xlu0 %98, %v81
  %v100 = vpop.permute.xlu0 %99
  %v102 = vadd.f32 %v62, %v85
  %v103 = vadd.f32 %v63, %v85
  %v104 = vadd.f32 %v64, %v90
  %v105 = vadd.f32 %v65, %v90
  %v106 = vadd.f32 %v66, %v95
  %v107 = vadd.f32 %v67, %v95
  %v108 = vadd.f32 %v68, %v100
  %v109 = vadd.f32 %v69, %v100
  %v110 = vadd.f32 %v70, %v85
  %v111 = vadd.f32 %v71, %v85
  %v112 = vadd.f32 %v72, %v90
  %v113 = vadd.f32 %v73, %v90
  %v114 = vadd.f32 %v74, %v95
  %v115 = vadd.f32 %v75, %v95
  %v116 = vadd.f32 %v76, %v100
  %v117 = vadd.f32 %v77, %v100
  %v118 = vmul.f32 %v102, 0.5
  %v119 = vmul.f32 %v103, 0.5
  %v120 = vmul.f32 %v104, 0.5
  %v121 = vmul.f32 %v105, 0.5
  %v122 = vmul.f32 %v106, 0.5
  %v123 = vmul.f32 %v107, 0.5
  %v124 = vmul.f32 %v108, 0.5
  %v125 = vmul.f32 %v109, 0.5
  %v126 = vmul.f32 %v110, 0.5
  %v127 = vmul.f32 %v111, 0.5
  %v128 = vmul.f32 %v112, 0.5
  %v129 = vmul.f32 %v113, 0.5
  %v130 = vmul.f32 %v114, 0.5
  %v131 = vmul.f32 %v115, 0.5
  %v132 = vmul.f32 %v116, 0.5
  %v133 = vmul.f32 %v117, 0.5
  %v134 = vmul.f32 %v102, 0.044715
  %v135 = vmul.f32 %v103, 0.044715
  %v136 = vmul.f32 %v104, 0.044715
  %v137 = vmul.f32 %v105, 0.044715
  %v138 = vmul.f32 %v106, 0.044715
  %v139 = vmul.f32 %v107, 0.044715
  %v140 = vmul.f32 %v108, 0.044715
  %v141 = vmul.f32 %v109, 0.044715
  %v142 = vmul.f32 %v110, 0.044715
  %v143 = vmul.f32 %v111, 0.044715
  %v144 = vmul.f32 %v112, 0.044715
  %v145 = vmul.f32 %v113, 0.044715
  %v146 = vmul.f32 %v114, 0.044715
  %v147 = vmul.f32 %v115, 0.044715
  %v148 = vmul.f32 %v116, 0.044715
  %v149 = vmul.f32 %v117, 0.044715
  %v150 = vmul.f32 %v134, %v102
  %v151 = vmul.f32 %v135, %v103
  %v152 = vmul.f32 %v136, %v104
  %v153 = vmul.f32 %v137, %v105
  %v154 = vmul.f32 %v138, %v106
  %v155 = vmul.f32 %v139, %v107
  %v156 = vmul.f32 %v140, %v108
  %v157 = vmul.f32 %v141, %v109
  %v158 = vmul.f32 %v142, %v110
  %v159 = vmul.f32 %v143, %v111
  %v160 = vmul.f32 %v144, %v112
  %v161 = vmul.f32 %v145, %v113
  %v162 = vmul.f32 %v146, %v114
  %v163 = vmul.f32 %v147, %v115
  %v164 = vmul.f32 %v148, %v116
  %v165 = vmul.f32 %v149, %v117
  %v166 = vmul.f32 %v150, %v102
  %v167 = vmul.f32 %v151, %v103
  %v168 = vmul.f32 %v152, %v104
  %v169 = vmul.f32 %v153, %v105
  %v170 = vmul.f32 %v154, %v106
  %v171 = vmul.f32 %v155, %v107
  %v172 = vmul.f32 %v156, %v108
  %v173 = vmul.f32 %v157, %v109
  %v174 = vmul.f32 %v158, %v110
  %v175 = vmul.f32 %v159, %v111
  %v176 = vmul.f32 %v160, %v112
  %v177 = vmul.f32 %v161, %v113
  %v178 = vmul.f32 %v162, %v114
  %v179 = vmul.f32 %v163, %v115
  %v180 = vmul.f32 %v164, %v116
  %v181 = vmul.f32 %v165, %v117
  %v182 = vadd.f32 %v102, %v166
  %v183 = vadd.f32 %v103, %v167
  %v184 = vadd.f32 %v104, %v168
  %v185 = vadd.f32 %v105, %v169
  %v186 = vadd.f32 %v106, %v170
  %v187 = vadd.f32 %v107, %v171
  %v188 = vadd.f32 %v108, %v172
  %v189 = vadd.f32 %v109, %v173
  %v190 = vadd.f32 %v110, %v174
  %v191 = vadd.f32 %v111, %v175
  %v192 = vadd.f32 %v112, %v176
  %v193 = vadd.f32 %v113, %v177
  %v194 = vadd.f32 %v114, %v178
  %v195 = vadd.f32 %v115, %v179
  %v196 = vadd.f32 %v116, %v180
  %v197 = vadd.f32 %v117, %v181
  %v198 = vmul.f32 %v182, 0.7978846
  %v199 = vmul.f32 %v183, 0.7978846
  %v200 = vmul.f32 %v184, 0.7978846
  %v201 = vmul.f32 %v185, 0.7978846
  %v202 = vmul.f32 %v186, 0.7978846
  %v203 = vmul.f32 %v187, 0.7978846
  %v204 = vmul.f32 %v188, 0.7978846
  %v205 = vmul.f32 %v189, 0.7978846
  %v206 = vmul.f32 %v190, 0.7978846
  %v207 = vmul.f32 %v191, 0.7978846
  %v208 = vmul.f32 %v192, 0.7978846
  %v209 = vmul.f32 %v193, 0.7978846
  %v210 = vmul.f32 %v194, 0.7978846
  %v211 = vmul.f32 %v195, 0.7978846
  %v212 = vmul.f32 %v196, 0.7978846
  %v213 = vmul.f32 %v197, 0.7978846
  %v214 = vtanh.pop %v198
  %v215 = vtanh.pop %v199
  %v216 = vtanh.pop %v200
  %v217 = vtanh.pop %v201
  %v218 = vtanh.pop %v202
  %v219 = vtanh.pop %v203
  %v220 = vtanh.pop %v204
  %v221 = vtanh.pop %v205
  %v222 = vtanh.pop %v206
  %v223 = vtanh.pop %v207
  %v224 = vtanh.pop %v208
  %v225 = vtanh.pop %v209
  %v226 = vtanh.pop %v210
  %v227 = vtanh.pop %v211
  %v228 = vtanh.pop %v212
  %v229 = vtanh.pop %v213
  %v230 = vadd.f32 %v214, 1.0
  %v231 = vadd.f32 %v215, 1.0
  %v232 = vadd.f32 %v216, 1.0
  %v233 = vadd.f32 %v217, 1.0
  %v234 = vadd.f32 %v218, 1.0
  %v235 = vadd.f32 %v219, 1.0
  %v236 = vadd.f32 %v220, 1.0
  %v237 = vadd.f32 %v221, 1.0
  %v238 = vadd.f32 %v222, 1.0
  %v239 = vadd.f32 %v223, 1.0
  %v240 = vadd.f32 %v224, 1.0
  %v241 = vadd.f32 %v225, 1.0
  %v242 = vadd.f32 %v226, 1.0
  %v243 = vadd.f32 %v227, 1.0
  %v244 = vadd.f32 %v228, 1.0
  %v245 = vadd.f32 %v229, 1.0
  %v246 = vmul.f32 %v118, %v230
  %v247 = vmul.f32 %v119, %v231
  %v248 = vmul.f32 %v120, %v232
  %v249 = vmul.f32 %v121, %v233
  %v250 = vmul.f32 %v122, %v234
  %v251 = vmul.f32 %v123, %v235
  %v252 = vmul.f32 %v124, %v236
  %v253 = vmul.f32 %v125, %v237
  %v254 = vmul.f32 %v126, %v238
  %v255 = vmul.f32 %v127, %v239
  %v256 = vmul.f32 %v128, %v240
  %v257 = vmul.f32 %v129, %v241
  %v258 = vmul.f32 %v130, %v242
  %v259 = vmul.f32 %v131, %v243
  %v260 = vmul.f32 %v132, %v244
  %v261 = vmul.f32 %v133, %v245
  %262 = vst [vmem:[%s3] sm:$0xff] %v246
  %263 = vst [vmem:[%s3 + $0x8] sm:$0xff] %v247
  %264 = vst [vmem:[%s3 + $0x10] sm:$0xff] %v248
  %265 = vst [vmem:[%s3 + $0x18] sm:$0xff] %v249
  %266 = vst [vmem:[%s3 + $0x20] sm:$0xff] %v250
  %267 = vst [vmem:[%s3 + $0x28] sm:$0xff] %v251
  %268 = vst [vmem:[%s3 + $0x30] sm:$0xff] %v252
  %269 = vst [vmem:[%s3 + $0x38] sm:$0xff] %v253
  %270 = vst [vmem:[%s3 + $0x40] sm:$0xff] %v254
  %271 = vst [vmem:[%s3 + $0x48] sm:$0xff] %v255
  %272 = vst [vmem:[%s3 + $0x50] sm:$0xff] %v256
  %273 = vst [vmem:[%s3 + $0x58] sm:$0xff] %v257
  %274 = vst [vmem:[%s3 + $0x60] sm:$0xff] %v258
  %275 = vst [vmem:[%s3 + $0x68] sm:$0xff] %v259
  %276 = vst [vmem:[%s3 + $0x70] sm:$0xff] %v260
  %277 = vst [vmem:[%s3 + $0x78] sm:$0xff] %v261
  // Predicated region
  $region14: #{decoding_block_forward.3} parent=0 // pred_check
    _
  $region15: #{decoding_block_forward.3} parent=0 // pred_check_branch
    %279 = sbr.rel (0) target = $region17
  $region16: #{decoding_block_forward.3} parent=0 // pred_region
    _
  $region17: #{decoding_block_forward.3} parent=0 // pred_fallthru
    _
  // Predicated region
  $region18: #{decoding_block_forward.3} parent=0 // pred_check
    _
  $region19: #{decoding_block_forward.3} parent=0 // pred_check_branch
    %281 = sbr.rel (0) target = $region21
  $region20: #{decoding_block_forward.3} parent=0 // pred_region
    _
  $region21: #{decoding_block_forward.3} parent=0 // pred_fallthru
    _

// kernel: decoding_block_forward.2
$region0: #{decoding_block_forward.2}
  #allocation0 [shape = 'u32[]', space=smem, size = 0x4, offset = 0x4, fixed_abs, tag = 'smem constant byte address 0x4 - core index']
  #allocation1 [shape = 'u32[144,128]{1,0:T(1,128)}', space=vmem, size = 0x12000, scoped, tag = 'internal scratch']
  %s0 = inlined_call_operand.vmem [shape: f32[2,32,256], index: 0, kind: input, shape index: {}]
  %s1 = inlined_call_operand.vmem [shape: bf16[8,32], index: 1, kind: input, shape index: {}]
  %s2 = inlined_call_operand.vmem [shape: f32[8,1], index: 2, kind: input, shape index: {}]
  %s3 = inlined_call_operand.vmem [shape: bf16[8,72], index: 3, kind: input, shape index: {}]
  %s4 = inlined_call_operand.vmem [shape: f32[8,1], index: 4, kind: input, shape index: {}]
  %s5 = inlined_call_operand.vmem [shape: bf16[8,72], index: 5, kind: input, shape index: {}]
  %s6 = inlined_call_operand.vmem [shape: f32[8,1], index: 6, kind: input, shape index: {}]
  %s7 = inlined_call_operand.vmem [shape: bf16[32,8], index: 7, kind: input, shape index: {}]
  %s8 = inlined_call_operand.vmem [shape: f32[32,1], index: 8, kind: input, shape index: {}]
  %s9 = inlined_call_operand.vmem [shape: bf16[2,32,256], index: 9, kind: output, shape index: {0}]
  %s10 = inlined_call_operand.vmem [shape: f32[2,32,2], index: 10, kind: output, shape index: {1}]
  %11 = xla_tuple %s9, %s10
  %s12 = sld [smem:[#allocation0]]
  $region54: #{decoding_block_forward.2} parent=0
    _
  %s14 = ssub.s32 1, %s12
  %s15 = scalar_select 0, %s14, %s12
  // Predicated region
  $region2: #{decoding_block_forward.2} parent=0 // pred_check
    _
  $region3: #{decoding_block_forward.2} parent=0 // pred_check_branch
    %17 = sbr.rel (0) target = $region5
  $region4: #{decoding_block_forward.2} parent=0 // pred_region
    _
  $region5: #{decoding_block_forward.2} parent=0 // pred_fallthru
    _
  // Predicated region
  $region6: #{decoding_block_forward.2} parent=0 // pred_check
    _
  $region7: #{decoding_block_forward.2} parent=0 // pred_check_branch
    %19 = sbr.rel (0) target = $region9
  $region8: #{decoding_block_forward.2} parent=0 // pred_region
    _
  $region9: #{decoding_block_forward.2} parent=0 // pred_fallthru
    _
  // Predicated region
  $region10: #{decoding_block_forward.2} parent=0 // pred_check
    _
  $region11: #{decoding_block_forward.2} parent=0 // pred_check_branch
    %21 = sbr.rel (0) target = $region13
  $region12: #{decoding_block_forward.2} parent=0 // pred_region
    _
  $region13: #{decoding_block_forward.2} parent=0 // pred_fallthru
    _
  // Predicated region
  $region14: #{decoding_block_forward.2} parent=0 // pred_check
    _
  $region15: #{decoding_block_forward.2} parent=0 // pred_check_branch
    %23 = sbr.rel (0) target = $region17
  $region16: #{decoding_block_forward.2} parent=0 // pred_region
    _
  $region17: #{decoding_block_forward.2} parent=0 // pred_fallthru
    _
  // Predicated region
  $region18: #{decoding_block_forward.2} parent=0 // pred_check
    _
  $region19: #{decoding_block_forward.2} parent=0 // pred_check_branch
    %25 = sbr.rel (0) target = $region21
  $region20: #{decoding_block_forward.2} parent=0 // pred_region
    _
  $region21: #{decoding_block_forward.2} parent=0 // pred_fallthru
    _
  // Predicated region
  $region22: #{decoding_block_forward.2} parent=0 // pred_check
    _
  $region23: #{decoding_block_forward.2} parent=0 // pred_check_branch
    %27 = sbr.rel (0) target = $region25
  $region24: #{decoding_block_forward.2} parent=0 // pred_region
    _
  $region25: #{decoding_block_forward.2} parent=0 // pred_fallthru
    _
  // Predicated region
  $region26: #{decoding_block_forward.2} parent=0 // pred_check
    _
  $region27: #{decoding_block_forward.2} parent=0 // pred_check_branch
    %29 = sbr.rel (0) target = $region29
  $region28: #{decoding_block_forward.2} parent=0 // pred_region
    _
  $region29: #{decoding_block_forward.2} parent=0 // pred_fallthru
    _
  // Predicated region
  $region30: #{decoding_block_forward.2} parent=0 // pred_check
    _
  $region31: #{decoding_block_forward.2} parent=0 // pred_check_branch
    %31 = sbr.rel (0) target = $region33
  $region32: #{decoding_block_forward.2} parent=0 // pred_region
    _
  $region33: #{decoding_block_forward.2} parent=0 // pred_fallthru
    _
  // Predicated region
  $region34: #{decoding_block_forward.2} parent=0 // pred_check
    _
  $region35: #{decoding_block_forward.2} parent=0 // pred_check_branch
    %33 = sbr.rel (0) target = $region37
  $region36: #{decoding_block_forward.2} parent=0 // pred_region
    _
  $region37: #{decoding_block_forward.2} parent=0 // pred_fallthru
    _
  %v35 = vlaneseq
  %v36 = vand.u32 %v35, 127
  %v37 = vadd.s32 %v36, 128
  %vm38 = vcmp.lt.s32.totalorder %v36, 0
  %v39 = vsub.s32 0, %v36
  %v40 = vsel %vm38, %v39, %v36
  %v41 = vshrl.u32 %v40, 4
  %v42 = vand.u32 %v40, 15
  %v43 = vsub.s32 0, %v42
  %v44 = vsel %vm38, %v43, %v42
  %vm45 = vcmp.lt.s32.totalorder %v37, 0
  %v46 = vsub.s32 0, %v37
  %v47 = vsel %vm45, %v46, %v37
  %v48 = vshrl.u32 %v47, 4
  %v49 = vand.u32 %v47, 15
  %v50 = vsub.s32 0, %v49
  %v51 = vsel %vm45, %v50, %v49
  %vm52 = vcmp.ne.s32.totalorder %v44, 0
  %vm53 = vcmp.ne.s32.totalorder %v51, 0
  %vm54 = vcmp.lt.s32.totalorder %v44, 0
  %vm55 = vcmp.lt.s32.totalorder %v51, 0
  %vm56 = vmand %vm54, %vm52
  %vm57 = vmand %vm55, %vm53
  %v58 = vadd.s32 %v44, 16
  %v59 = vadd.s32 %v51, 16
  %v60 = vsel %vm56, %v58, %v44
  %v61 = vsel %vm57, %v59, %v51
  %vm62 = vcmp.ge.s32.totalorder %v60, 1
  %vm63 = vcmp.ge.s32.totalorder %v61, 1
  %vm64 = vcmp.le.s32.totalorder %v60, 14
  %vm65 = vcmp.le.s32.totalorder %v61, 14
  %vm66 = vcmp.ge.s32.totalorder %v36, 16
  %vm67 = vcmp.ge.s32.totalorder %v37, 16
  %vm68 = vcmp.lt.s32.totalorder %v36, 240
  %vm69 = vcmp.lt.s32.totalorder %v37, 240
  %vm70 = vmand %vm66, %vm62
  %vm71 = vmand %vm67, %vm63
  %v72 = vsel %vm70, 1, 0
  %v73 = vsel %vm71, 1, 0
  %v74 = vcvt.s32.f32 %v72
  %v75 = vcvt.s32.f32 %v73
  %v76 = vsel %vm66, 1, 0
  %v77 = vsel %vm67, 1, 0
  %v78 = vcvt.s32.f32 %v76
  %v79 = vcvt.s32.f32 %v77
  %vm80 = vmand %vm66, %vm64
  %vm81 = vmand %vm67, %vm65
  %v82 = vsel %vm80, 1, 0
  %v83 = vsel %vm81, 1, 0
  %v84 = vcvt.s32.f32 %v82
  %v85 = vcvt.s32.f32 %v83
  %v86 = vsel %vm62, 1, 0
  %v87 = vsel %vm63, 1, 0
  %v88 = vcvt.s32.f32 %v86
  %v89 = vcvt.s32.f32 %v87
  %v90 = vsel %vm64, 1, 0
  %v91 = vsel %vm65, 1, 0
  %v92 = vcvt.s32.f32 %v90
  %v93 = vcvt.s32.f32 %v91
  %vm94 = vmand %vm68, %vm62
  %vm95 = vmand %vm69, %vm63
  %v96 = vsel %vm94, 1, 0
  %v97 = vsel %vm95, 1, 0
  %v98 = vcvt.s32.f32 %v96
  %v99 = vcvt.s32.f32 %v97
  %v100 = vsel %vm68, 1, 0
  %v101 = vsel %vm69, 1, 0
  %v102 = vcvt.s32.f32 %v100
  %v103 = vcvt.s32.f32 %v101
  %vm104 = vmand %vm68, %vm64
  %vm105 = vmand %vm69, %vm65
  %v106 = vsel %vm104, 1, 0
  %v107 = vsel %vm105, 1, 0
  %v108 = vcvt.s32.f32 %v106
  %v109 = vcvt.s32.f32 %v107
  %v110 = vld [vmem:[%s1] sm:$0xf]
  %v111 = vld [vmem:[%s2] sm:$0xff]
  %v112 = vld [vmem:[%s3] sm:$0xf]
  %v113 = vld [vmem:[%s4] sm:$0xff]
  %v114 = vld [vmem:[%s5] sm:$0xf]
  %v115 = vld [vmem:[%s6] sm:$0xff]
  %v116 = vld [vmem:[%s7] sm:$0xf]
  %v117 = vld [vmem:[%s7 + $0x4] sm:$0xf]
  %v118 = vld [vmem:[%s7 + $0x8] sm:$0xf]
  %v119 = vld [vmem:[%s7 + $0xc] sm:$0xf]
  %v120 = vld [vmem:[%s8] sm:$0xff]
  %v121 = vld [vmem:[%s8 + $0x8] sm:$0xff]
  %v122 = vld [vmem:[%s8 + $0x10] sm:$0xff]
  %v123 = vld [vmem:[%s8 + $0x18] sm:$0xff]
  %v124 = vld [vmem:[%s0] sm:$0xff]
  %v125 = vld [vmem:[%s0 + $0x8] sm:$0xff]
  %v126 = vld [vmem:[%s0 + $0x10] sm:$0xff]
  %v127 = vld [vmem:[%s0 + $0x18] sm:$0xff]
  %v128 = vld [vmem:[%s0 + $0x20] sm:$0xff]
  %v129 = vld [vmem:[%s0 + $0x28] sm:$0xff]
  %v130 = vld [vmem:[%s0 + $0x30] sm:$0xff]
  %v131 = vld [vmem:[%s0 + $0x38] sm:$0xff]
  %v132 = vpack.c.bf16 %v126, %v124
  %v133 = vpack.c.bf16 %v127, %v125
  %v134 = vpack.c.bf16 %v130, %v128
  %v135 = vpack.c.bf16 %v131, %v129
  %137 = vset.pattern.permute.xlu0 0
  %138 = vperm.xlu0 %137, %v111
  %v139 = vpop.permute.xlu0 %138
  %vm141 = vcmask 261120
  %v143 = vsel %vm141, %v110, 0
  %145 = vmatprep.subr.bf16.mxu0 %v133
  %146 = vmatpush1.bf16.msra.mxu0 %v132
  %147 = vmatprep.subr.bf16.mxu0 %v135
  %148 = vmatpush1.bf16.msra.mxu0 %v134
  %149 = vmatprep.subr.bf16.mxu0 0
  %150 = vmatpush1.bf16.msra.mxu0 0
  %151 = vmatprep.subr.bf16.mxu0 0
  %152 = vmatpush1.bf16.msra.mxu0 0
  %153 = vmatprep.subr.bf16.mxu0 0
  %154 = vmatpush1.bf16.msra.mxu0 0
  %155 = vmatprep.subr.bf16.mxu0 0
  %156 = vmatpush1.bf16.msra.mxu0 0
  %157 = vmatprep.subr.bf16.mxu0 0
  %158 = vmatpush1.bf16.msra.mxu0 0
  %159 = vmatprep.subr.bf16.mxu0 0
  %160 = vmatpush1.bf16.msra.mxu0 0
  %161 = vmatprep.subr.bf16.mxu0 0
  %162 = vmatpush1.bf16.msra.mxu0 0
  %163 = vmatprep.subr.bf16.mxu0 0
  %164 = vmatpush1.bf16.msra.mxu0 0
  %165 = vmatprep.subr.bf16.mxu0 0
  %166 = vmatpush1.bf16.msra.mxu0 0
  %167 = vmatprep.subr.bf16.mxu0 0
  %168 = vmatpush1.bf16.msra.mxu0 0
  %169 = vmatprep.subr.bf16.mxu0 0
  %170 = vmatpush1.bf16.msra.mxu0 0
  %171 = vmatprep.subr.bf16.mxu0 0
  %172 = vmatpush1.bf16.msra.mxu0 0
  %173 = vmatprep.subr.bf16.mxu0 0
  %174 = vmatpush1.bf16.msra.mxu0 0
  %175 = vmatprep.subr.bf16.mxu0 0
  %176 = vmatpush1.bf16.msra.mxu0 0
  %177 = vmatprep.mubr.bf16.mxu0 0
  %178 = vmatmul.mubr.bf16.gmra.mrb[0].mxu0 %v143
  %v179 = vpop.f32.mrb[0].mxu0
  %v180 = vadd.f32 %v139, %v179
  %v181 = vpop.f32.mrb[0].mxu0
  %v182 = vadd.f32 %v139, %v181
  %v183 = vpop.f32.mrb[0].mxu0
  %v184 = vpop.f32.mrb[0].mxu0
  %185 = vdwg.mxu0
  %v186 = vmul.f32 %v180, 0.5
  %v187 = vmul.f32 %v182, 0.5
  %v188 = vmul.f32 %v180, 0.044715
  %v189 = vmul.f32 %v182, 0.044715
  %v190 = vmul.f32 %v188, %v180
  %v191 = vmul.f32 %v189, %v182
  %v192 = vmul.f32 %v190, %v180
  %v193 = vmul.f32 %v191, %v182
  %v194 = vadd.f32 %v180, %v192
  %v195 = vadd.f32 %v182, %v193
  %v196 = vmul.f32 %v194, 0.7978846
  %v197 = vmul.f32 %v195, 0.7978846
  %v198 = vtanh.pop %v196
  %v199 = vtanh.pop %v197
  %v200 = vadd.f32 %v198, 1.0
  %v201 = vadd.f32 %v199, 1.0
  %v202 = vmul.f32 %v186, %v200
  %v203 = vmul.f32 %v187, %v201
  %204 = vrot.lane.b32.xlu0 %v202, 17
  %v205 = vpop.permute.xlu0 %204
  %206 = vrot.lane.b32.xlu0 %v203, 17
  %v207 = vpop.permute.xlu0 %206
  %vm208 = vcmp.lt.s32.totalorder %v36, 17
  %v209 = vsel %vm208, %v205, %v207
  %v210 = vsel %vm208, %v207, %v205
  %v211 = vmul.f32 %v210, %v74
  %v212 = vmul.f32 %v209, %v75
  %213 = vrot.lane.b32.xlu0 %v202, 16
  %v214 = vpop.permute.xlu0 %213
  %215 = vrot.lane.b32.xlu0 %v203, 16
  %v216 = vpop.permute.xlu0 %215
  %vm217 = vcmp.lt.s32.totalorder %v36, 16
  %v218 = vsel %vm217, %v214, %v216
  %v219 = vsel %vm217, %v216, %v214
  %v220 = vmul.f32 %v219, %v78
  %v221 = vmul.f32 %v218, %v79
  %222 = vrot.lane.b32.xlu0 %v202, 15
  %v223 = vpop.permute.xlu0 %222
  %224 = vrot.lane.b32.xlu0 %v203, 15
  %v225 = vpop.permute.xlu0 %224
  %vm226 = vcmp.lt.s32.totalorder %v36, 15
  %v227 = vsel %vm226, %v223, %v225
  %v228 = vsel %vm226, %v225, %v223
  %v229 = vmul.f32 %v228, %v84
  %v230 = vmul.f32 %v227, %v85
  %231 = vrot.lane.b32.xlu0 %v202, 1
  %v232 = vpop.permute.xlu0 %231
  %233 = vrot.lane.b32.xlu0 %v203, 1
  %v234 = vpop.permute.xlu0 %233
  %vm235 = vcmp.lt.s32.totalorder %v36, 1
  %v236 = vsel %vm235, %v232, %v234
  %v237 = vsel %vm235, %v234, %v232
  %v238 = vmul.f32 %v237, %v88
  %v239 = vmul.f32 %v236, %v89
  %240 = vrot.lane.b32.xlu0 %v202, 127
  %v241 = vpop.permute.xlu0 %240
  %242 = vrot.lane.b32.xlu0 %v203, 127
  %v243 = vpop.permute.xlu0 %242
  %vm244 = vcmp.lt.s32.totalorder %v36, 127
  %v245 = vsel %vm244, %v241, %v243
  %v246 = vsel %vm244, %v243, %v241
  %v247 = vmul.f32 %v245, %v92
  %v248 = vmul.f32 %v246, %v93
  %249 = vrot.lane.b32.xlu0 %v202, 113
  %v250 = vpop.permute.xlu0 %249
  %251 = vrot.lane.b32.xlu0 %v203, 113
  %v252 = vpop.permute.xlu0 %251
  %vm253 = vcmp.lt.s32.totalorder %v36, 113
  %v254 = vsel %vm253, %v250, %v252
  %v255 = vsel %vm253, %v252, %v250
  %v256 = vmul.f32 %v254, %v98
  %v257 = vmul.f32 %v255, %v99
  %258 = vrot.lane.b32.xlu0 %v202, 112
  %v259 = vpop.permute.xlu0 %258
  %260 = vrot.lane.b32.xlu0 %v203, 112
  %v261 = vpop.permute.xlu0 %260
  %vm262 = vcmp.lt.s32.totalorder %v36, 112
  %v263 = vsel %vm262, %v259, %v261
  %v264 = vsel %vm262, %v261, %v259
  %v265 = vmul.f32 %v263, %v102
  %v266 = vmul.f32 %v264, %v103
  %267 = vrot.lane.b32.xlu0 %v202, 111
  %v268 = vpop.permute.xlu0 %267
  %269 = vrot.lane.b32.xlu0 %v203, 111
  %v270 = vpop.permute.xlu0 %269
  %vm271 = vcmp.lt.s32.totalorder %v36, 111
  %v272 = vsel %vm271, %v268, %v270
  %v273 = vsel %vm271, %v270, %v268
  %v274 = vmul.f32 %v272, %v108
  %v275 = vmul.f32 %v273, %v109
  %v276 = vpack.c.bf16 %v220, %v211
  %v277 = vpack.c.bf16 %v221, %v212
  %v278 = vpack.c.bf16 %v238, %v229
  %v279 = vpack.c.bf16 %v239, %v230
  %v280 = vpack.c.bf16 %v247, %v202
  %v281 = vpack.c.bf16 %v248, %v203
  %v282 = vpack.c.bf16 %v265, %v256
  %v283 = vpack.c.bf16 %v266, %v257
  %v284 = vpack.c.bf16 %v274, %v274
  %v285 = vpack.c.bf16 %v275, %v275
  %287 = vset.pattern.permute.xlu0 0
  %288 = vperm.xlu0 %287, %v113
  %v289 = vpop.permute.xlu0 %288
  %vm291 = vcmask 588800
  %v293 = vsel %vm291, %v112, 0
  %vm295 = vcmask 1043456
  %v297 = vsel %vm295, %v284, 0
  %v300 = vsel %vm295, %v285, 0
  %302 = vmatprep.subr.bf16.mxu0 %v277
  %303 = vmatpush1.bf16.msra.mxu0 %v276
  %304 = vmatprep.subr.bf16.mxu0 %v279
  %305 = vmatpush1.bf16.msra.mxu0 %v278
  %306 = vmatprep.subr.bf16.mxu0 %v281
  %307 = vmatpush1.bf16.msra.mxu0 %v280
  %308 = vmatprep.subr.bf16.mxu0 %v283
  %309 = vmatpush1.bf16.msra.mxu0 %v282
  %310 = vmatprep.subr.bf16.mxu0 %v300
  %311 = vmatpush1.bf16.msra.mxu0 %v297
  %312 = vmatprep.subr.bf16.mxu0 0
  %313 = vmatpush1.bf16.msra.mxu0 0
  %314 = vmatprep.subr.bf16.mxu0 0
  %315 = vmatpush1.bf16.msra.mxu0 0
  %316 = vmatprep.subr.bf16.mxu0 0
  %317 = vmatpush1.bf16.msra.mxu0 0
  %318 = vmatprep.subr.bf16.mxu0 0
  %319 = vmatpush1.bf16.msra.mxu0 0
  %320 = vmatprep.subr.bf16.mxu0 0
  %321 = vmatpush1.bf16.msra.mxu0 0
  %322 = vmatprep.subr.bf16.mxu0 0
  %323 = vmatpush1.bf16.msra.mxu0 0
  %324 = vmatprep.subr.bf16.mxu0 0
  %325 = vmatpush1.bf16.msra.mxu0 0
  %326 = vmatprep.subr.bf16.mxu0 0
  %327 = vmatpush1.bf16.msra.mxu0 0
  %328 = vmatprep.subr.bf16.mxu0 0
  %329 = vmatpush1.bf16.msra.mxu0 0
  %330 = vmatprep.subr.bf16.mxu0 0
  %331 = vmatpush1.bf16.msra.mxu0 0
  %332 = vmatprep.subr.bf16.mxu0 0
  %333 = vmatpush1.bf16.msra.mxu0 0
  %334 = vmatprep.mubr.bf16.mxu0 0
  %335 = vmatmul.mubr.bf16.gmra.mrb[0].mxu0 %v293
  %v336 = vpop.f32.mrb[0].mxu0
  %v337 = vadd.f32 %v289, %v336
  %v338 = vpop.f32.mrb[0].mxu0
  %v339 = vadd.f32 %v289, %v338
  %v340 = vpop.f32.mrb[0].mxu0
  %v341 = vpop.f32.mrb[0].mxu0
  %342 = vdwg.mxu0
  %v343 = vmul.f32 %v337, 0.5
  %v344 = vmul.f32 %v339, 0.5
  %v345 = vmul.f32 %v337, 0.044715
  %v346 = vmul.f32 %v339, 0.044715
  %v347 = vmul.f32 %v345, %v337
  %v348 = vmul.f32 %v346, %v339
  %v349 = vmul.f32 %v347, %v337
  %v350 = vmul.f32 %v348, %v339
  %v351 = vadd.f32 %v337, %v349
  %v352 = vadd.f32 %v339, %v350
  %v353 = vmul.f32 %v351, 0.7978846
  %v354 = vmul.f32 %v352, 0.7978846
  %v355 = vtanh.pop %v353
  %v356 = vtanh.pop %v354
  %v357 = vadd.f32 %v355, 1.0
  %v358 = vadd.f32 %v356, 1.0
  %v359 = vmul.f32 %v343, %v357
  %v360 = vmul.f32 %v344, %v358
  %361 = vrot.lane.b32.xlu0 %v359, 17
  %v362 = vpop.permute.xlu0 %361
  %363 = vrot.lane.b32.xlu0 %v360, 17
  %v364 = vpop.permute.xlu0 %363
  %v365 = vsel %vm208, %v362, %v364
  %v366 = vsel %vm208, %v364, %v362
  %v367 = vmul.f32 %v366, %v74
  %v368 = vmul.f32 %v365, %v75
  %369 = vrot.lane.b32.xlu0 %v359, 16
  %v370 = vpop.permute.xlu0 %369
  %371 = vrot.lane.b32.xlu0 %v360, 16
  %v372 = vpop.permute.xlu0 %371
  %v373 = vsel %vm217, %v370, %v372
  %v374 = vsel %vm217, %v372, %v370
  %v375 = vmul.f32 %v374, %v78
  %v376 = vmul.f32 %v373, %v79
  %377 = vrot.lane.b32.xlu0 %v359, 15
  %v378 = vpop.permute.xlu0 %377
  %379 = vrot.lane.b32.xlu0 %v360, 15
  %v380 = vpop.permute.xlu0 %379
  %v381 = vsel %vm226, %v378, %v380
  %v382 = vsel %vm226, %v380, %v378
  %v383 = vmul.f32 %v382, %v84
  %v384 = vmul.f32 %v381, %v85
  %385 = vrot.lane.b32.xlu0 %v359, 1
  %v386 = vpop.permute.xlu0 %385
  %387 = vrot.lane.b32.xlu0 %v360, 1
  %v388 = vpop.permute.xlu0 %387
  %v389 = vsel %vm235, %v386, %v388
  %v390 = vsel %vm235, %v388, %v386
  %v391 = vmul.f32 %v390, %v88
  %v392 = vmul.f32 %v389, %v89
  %393 = vrot.lane.b32.xlu0 %v359, 127
  %v394 = vpop.permute.xlu0 %393
  %395 = vrot.lane.b32.xlu0 %v360, 127
  %v396 = vpop.permute.xlu0 %395
  %v397 = vsel %vm244, %v394, %v396
  %v398 = vsel %vm244, %v396, %v394
  %v399 = vmul.f32 %v397, %v92
  %v400 = vmul.f32 %v398, %v93
  %401 = vrot.lane.b32.xlu0 %v359, 113
  %v402 = vpop.permute.xlu0 %401
  %403 = vrot.lane.b32.xlu0 %v360, 113
  %v404 = vpop.permute.xlu0 %403
  %v405 = vsel %vm253, %v402, %v404
  %v406 = vsel %vm253, %v404, %v402
  %v407 = vmul.f32 %v405, %v98
  %v408 = vmul.f32 %v406, %v99
  %409 = vrot.lane.b32.xlu0 %v359, 112
  %v410 = vpop.permute.xlu0 %409
  %411 = vrot.lane.b32.xlu0 %v360, 112
  %v412 = vpop.permute.xlu0 %411
  %v413 = vsel %vm262, %v410, %v412
  %v414 = vsel %vm262, %v412, %v410
  %v415 = vmul.f32 %v413, %v102
  %v416 = vmul.f32 %v414, %v103
  %417 = vrot.lane.b32.xlu0 %v359, 111
  %v418 = vpop.permute.xlu0 %417
  %419 = vrot.lane.b32.xlu0 %v360, 111
  %v420 = vpop.permute.xlu0 %419
  %v421 = vsel %vm271, %v418, %v420
  %v422 = vsel %vm271, %v420, %v418
  %v423 = vmul.f32 %v421, %v108
  %v424 = vmul.f32 %v422, %v109
  %v425 = vpack.c.bf16 %v375, %v367
  %v426 = vpack.c.bf16 %v376, %v368
  %v427 = vpack.c.bf16 %v391, %v383
  %v428 = vpack.c.bf16 %v392, %v384
  %v429 = vpack.c.bf16 %v399, %v359
  %v430 = vpack.c.bf16 %v400, %v360
  %v431 = vpack.c.bf16 %v415, %v407
  %v432 = vpack.c.bf16 %v416, %v408
  %v433 = vpack.c.bf16 %v423, %v423
  %v434 = vpack.c.bf16 %v424, %v424
  %436 = vset.pattern.permute.xlu0 0
  %437 = vperm.xlu0 %436, %v115
  %v438 = vpop.permute.xlu0 %437
  %v441 = vsel %vm291, %v114, 0
  %v444 = vsel %vm295, %v433, 0
  %v447 = vsel %vm295, %v434, 0
  %449 = vmatprep.subr.bf16.mxu0 %v426
  %450 = vmatpush1.bf16.msra.mxu0 %v425
  %451 = vmatprep.subr.bf16.mxu0 %v428
  %452 = vmatpush1.bf16.msra.mxu0 %v427
  %453 = vmatprep.subr.bf16.mxu0 %v430
  %454 = vmatpush1.bf16.msra.mxu0 %v429
  %455 = vmatprep.subr.bf16.mxu0 %v432
  %456 = vmatpush1.bf16.msra.mxu0 %v431
  %457 = vmatprep.subr.bf16.mxu0 %v447
  %458 = vmatpush1.bf16.msra.mxu0 %v444
  %459 = vmatprep.subr.bf16.mxu0 0
  %460 = vmatpush1.bf16.msra.mxu0 0
  %461 = vmatprep.subr.bf16.mxu0 0
  %462 = vmatpush1.bf16.msra.mxu0 0
  %463 = vmatprep.subr.bf16.mxu0 0
  %464 = vmatpush1.bf16.msra.mxu0 0
  %465 = vmatprep.subr.bf16.mxu0 0
  %466 = vmatpush1.bf16.msra.mxu0 0
  %467 = vmatprep.subr.bf16.mxu0 0
  %468 = vmatpush1.bf16.msra.mxu0 0
  %469 = vmatprep.subr.bf16.mxu0 0
  %470 = vmatpush1.bf16.msra.mxu0 0
  %471 = vmatprep.subr.bf16.mxu0 0
  %472 = vmatpush1.bf16.msra.mxu0 0
  %473 = vmatprep.subr.bf16.mxu0 0
  %474 = vmatpush1.bf16.msra.mxu0 0
  %475 = vmatprep.subr.bf16.mxu0 0
  %476 = vmatpush1.bf16.msra.mxu0 0
  %477 = vmatprep.subr.bf16.mxu0 0
  %478 = vmatpush1.bf16.msra.mxu0 0
  %479 = vmatprep.subr.bf16.mxu0 0
  %480 = vmatpush1.bf16.msra.mxu0 0
  %481 = vmatprep.mubr.bf16.mxu0 0
  %482 = vmatmul.mubr.bf16.gmra.mrb[0].mxu0 %v441
  %v483 = vpop.f32.mrb[0].mxu0
  %v484 = vadd.f32 %v438, %v483
  %v485 = vpop.f32.mrb[0].mxu0
  %v486 = vadd.f32 %v438, %v485
  %v487 = vpop.f32.mrb[0].mxu0
  %v488 = vpop.f32.mrb[0].mxu0
  %489 = vdwg.mxu0
  %v490 = vmul.f32 %v484, 0.5
  %v491 = vmul.f32 %v486, 0.5
  %v492 = vmul.f32 %v484, 0.044715
  %v493 = vmul.f32 %v486, 0.044715
  %v494 = vmul.f32 %v492, %v484
  %v495 = vmul.f32 %v493, %v486
  %v496 = vmul.f32 %v494, %v484
  %v497 = vmul.f32 %v495, %v486
  %v498 = vadd.f32 %v484, %v496
  %v499 = vadd.f32 %v486, %v497
  %v500 = vmul.f32 %v498, 0.7978846
  %v501 = vmul.f32 %v499, 0.7978846
  %v502 = vtanh.pop %v500
  %v503 = vtanh.pop %v501
  %v504 = vadd.f32 %v502, 1.0
  %v505 = vadd.f32 %v503, 1.0
  %v506 = vmul.f32 %v490, %v504
  %v507 = vmul.f32 %v491, %v505
  %v508 = vpack.c.bf16 %v506, %v506
  %v509 = vpack.c.bf16 %v507, %v507
  %511 = vset.pattern.permute.xlu0 0
  %512 = vperm.xlu0 %511, %v120
  %v513 = vpop.permute.xlu0 %512
  %516 = vset.pattern.permute.xlu0 0
  %517 = vperm.xlu0 %516, %v121
  %v518 = vpop.permute.xlu0 %517
  %521 = vset.pattern.permute.xlu0 0
  %522 = vperm.xlu0 %521, %v122
  %v523 = vpop.permute.xlu0 %522
  %526 = vset.pattern.permute.xlu0 0
  %527 = vperm.xlu0 %526, %v123
  %v528 = vpop.permute.xlu0 %527
  %v534 = vunpack.c.l.b16 %v116
  %v535 = vunpack.c.l.b16 %v117
  %v536 = vunpack.c.l.b16 %v118
  %v537 = vunpack.c.l.b16 %v119
  %v538 = vpack.c.b16 %v535, %v534
  %v539 = vpack.c.b16 %v537, %v536
  %vm540 = vcmask 64512
  %v542 = vsel %vm540, %v538, 0
  %v545 = vsel %vm540, %v539, 0
  %v548 = vsel %vm295, %v508, 0
  %v551 = vsel %vm295, %v509, 0
  %553 = vmatprep.subr.bf16.mxu0 %v551
  %554 = vmatpush1.bf16.msra.mxu0 %v548
  %555 = vmatprep.subr.bf16.mxu0 0
  %556 = vmatpush1.bf16.msra.mxu0 0
  %557 = vmatprep.subr.bf16.mxu0 0
  %558 = vmatpush1.bf16.msra.mxu0 0
  %559 = vmatprep.subr.bf16.mxu0 0
  %560 = vmatpush1.bf16.msra.mxu0 0
  %561 = vmatprep.subr.bf16.mxu0 0
  %562 = vmatpush1.bf16.msra.mxu0 0
  %563 = vmatprep.subr.bf16.mxu0 0
  %564 = vmatpush1.bf16.msra.mxu0 0
  %565 = vmatprep.subr.bf16.mxu0 0
  %566 = vmatpush1.bf16.msra.mxu0 0
  %567 = vmatprep.subr.bf16.mxu0 0
  %568 = vmatpush1.bf16.msra.mxu0 0
  %569 = vmatprep.subr.bf16.mxu0 0
  %570 = vmatpush1.bf16.msra.mxu0 0
  %571 = vmatprep.subr.bf16.mxu0 0
  %572 = vmatpush1.bf16.msra.mxu0 0
  %573 = vmatprep.subr.bf16.mxu0 0
  %574 = vmatpush1.bf16.msra.mxu0 0
  %575 = vmatprep.subr.bf16.mxu0 0
  %576 = vmatpush1.bf16.msra.mxu0 0
  %577 = vmatprep.subr.bf16.mxu0 0
  %578 = vmatpush1.bf16.msra.mxu0 0
  %579 = vmatprep.subr.bf16.mxu0 0
  %580 = vmatpush1.bf16.msra.mxu0 0
  %581 = vmatprep.subr.bf16.mxu0 0
  %582 = vmatpush1.bf16.msra.mxu0 0
  %583 = vmatprep.subr.bf16.mxu0 0
  %584 = vmatpush1.bf16.msra.mxu0 0
  %585 = vmatprep.mubr.bf16.mxu0 0
  %586 = vmatmul.mubr.bf16.gmra.mrb[0].mxu0 %v542
  %v587 = vpop.f32.mrb[0].mxu0
  %v588 = vadd.f32 %v513, %v587
  %v589 = vpop.f32.mrb[0].mxu0
  %v590 = vadd.f32 %v513, %v589
  %v591 = vpop.f32.mrb[0].mxu0
  %v592 = vadd.f32 %v518, %v591
  %v593 = vpop.f32.mrb[0].mxu0
  %v594 = vadd.f32 %v518, %v593
  %595 = vmatprep.mubr.bf16.mxu0 0
  %596 = vmatmul.mubr.bf16.gmra.mrb[0].mxu0 %v545
  %v597 = vpop.f32.mrb[0].mxu0
  %v598 = vadd.f32 %v523, %v597
  %v599 = vpop.f32.mrb[0].mxu0
  %v600 = vadd.f32 %v523, %v599
  %v601 = vpop.f32.mrb[0].mxu0
  %v602 = vadd.f32 %v528, %v601
  %v603 = vpop.f32.mrb[0].mxu0
  %v604 = vadd.f32 %v528, %v603
  %605 = vdwg.mxu0
  %v606 = vadd.f32 %v588, %v124
  %v607 = vadd.f32 %v590, %v125
  %v608 = vadd.f32 %v592, %v126
  %v609 = vadd.f32 %v594, %v127
  %v610 = vadd.f32 %v598, %v128
  %v611 = vadd.f32 %v600, %v129
  %v612 = vadd.f32 %v602, %v130
  %v613 = vadd.f32 %v604, %v131
  %v614 = vpack.c.bf16 %v608, %v606
  %v615 = vpack.c.bf16 %v609, %v607
  %v616 = vpack.c.bf16 %v612, %v610
  %v617 = vpack.c.bf16 %v613, %v611
  %v622 = vunpack.c.l.b16 %v614
  %v623 = vunpack.c.l.b16 %v615
  %v624 = vunpack.c.h.b16 %v614
  %v625 = vunpack.c.h.b16 %v615
  %v626 = vunpack.c.l.b16 %v616
  %v627 = vunpack.c.l.b16 %v617
  %v628 = vunpack.c.h.b16 %v616
  %v629 = vunpack.c.h.b16 %v617
  %v630 = vpack.c.b16 %v623, %v622
  %v631 = vpack.c.b16 %v625, %v624
  %v632 = vpack.c.b16 %v627, %v626
  %v633 = vpack.c.b16 %v629, %v628
  %638 = vst [vmem:[%s9] sm:$0xff] %v630
  %639 = vst [vmem:[%s9 + $0x8] sm:$0xff] %v631
  %640 = vst [vmem:[%s9 + $0x10] sm:$0xff] %v632
  %641 = vst [vmem:[%s9 + $0x18] sm:$0xff] %v633
  %v642 = vadd.f32 %v606, %v607
  %643 = vadd.xlane.f32.xlu0 %v642
  %v644 = vpop.xlane.xlu0 %643
  %v645 = vadd.f32 %v608, %v609
  %646 = vadd.xlane.f32.xlu0 %v645
  %v647 = vpop.xlane.xlu0 %646
  %v648 = vadd.f32 %v610, %v611
  %649 = vadd.xlane.f32.xlu0 %v648
  %v650 = vpop.xlane.xlu0 %649
  %v651 = vadd.f32 %v612, %v613
  %652 = vadd.xlane.f32.xlu0 %v651
  %v653 = vpop.xlane.xlu0 %652
  %v654 = vmul.f32 %v606, %v606
  %v655 = vmul.f32 %v607, %v607
  %v656 = vmul.f32 %v608, %v608
  %v657 = vmul.f32 %v609, %v609
  %v658 = vmul.f32 %v610, %v610
  %v659 = vmul.f32 %v611, %v611
  %v660 = vmul.f32 %v612, %v612
  %v661 = vmul.f32 %v613, %v613
  %v662 = vadd.f32 %v654, %v655
  %663 = vadd.xlane.f32.xlu0 %v662
  %v664 = vpop.xlane.xlu0 %663
  %v665 = vadd.f32 %v656, %v657
  %666 = vadd.xlane.f32.xlu0 %v665
  %v667 = vpop.xlane.xlu0 %666
  %v668 = vadd.f32 %v658, %v659
  %669 = vadd.xlane.f32.xlu0 %v668
  %v670 = vpop.xlane.xlu0 %669
  %v671 = vadd.f32 %v660, %v661
  %672 = vadd.xlane.f32.xlu0 %v671
  %v673 = vpop.xlane.xlu0 %672
  %vm674 = vcmask 7168
  %v675 = vsel %vm674, %v644, %v664
  %v676 = vsel %vm674, %v647, %v667
  %v677 = vsel %vm674, %v650, %v670
  %v678 = vsel %vm674, %v653, %v673
  %vm679 = vcmask 15360
  %680 = vst.msk [vmem:[%s10] sm:$0xff] %vm679, %v675
  %681 = vst.msk [vmem:[%s10 + $0x8] sm:$0xff] %vm679, %v676
  %682 = vst.msk [vmem:[%s10 + $0x10] sm:$0xff] %vm679, %v677
  %683 = vst.msk [vmem:[%s10 + $0x18] sm:$0xff] %vm679, %v678
  %s684 = scalar_lea.vmem %s0, 64
  %v685 = vld [vmem:[%s684] sm:$0xff]
  %v686 = vld [vmem:[%s684 + $0x8] sm:$0xff]
  %v687 = vld [vmem:[%s684 + $0x10] sm:$0xff]
  %v688 = vld [vmem:[%s684 + $0x18] sm:$0xff]
  %v689 = vld [vmem:[%s684 + $0x20] sm:$0xff]
  %v690 = vld [vmem:[%s684 + $0x28] sm:$0xff]
  %v691 = vld [vmem:[%s684 + $0x30] sm:$0xff]
  %v692 = vld [vmem:[%s684 + $0x38] sm:$0xff]
  %v693 = vpack.c.bf16 %v687, %v685
  %v694 = vpack.c.bf16 %v688, %v686
  %v695 = vpack.c.bf16 %v691, %v689
  %v696 = vpack.c.bf16 %v692, %v690
  %697 = vmatprep.subr.bf16.mxu0 %v694
  %698 = vmatpush1.bf16.msra.mxu0 %v693
  %699 = vmatprep.subr.bf16.mxu0 %v696
  %700 = vmatpush1.bf16.msra.mxu0 %v695
  %701 = vmatprep.subr.bf16.mxu0 0
  %702 = vmatpush1.bf16.msra.mxu0 0
  %703 = vmatprep.subr.bf16.mxu0 0
  %704 = vmatpush1.bf16.msra.mxu0 0
  %705 = vmatprep.subr.bf16.mxu0 0
  %706 = vmatpush1.bf16.msra.mxu0 0
  %707 = vmatprep.subr.bf16.mxu0 0
  %708 = vmatpush1.bf16.msra.mxu0 0
  %709 = vmatprep.subr.bf16.mxu0 0
  %710 = vmatpush1.bf16.msra.mxu0 0
  %711 = vmatprep.subr.bf16.mxu0 0
  %712 = vmatpush1.bf16.msra.mxu0 0
  %713 = vmatprep.subr.bf16.mxu0 0
  %714 = vmatpush1.bf16.msra.mxu0 0
  %715 = vmatprep.subr.bf16.mxu0 0
  %716 = vmatpush1.bf16.msra.mxu0 0
  %717 = vmatprep.subr.bf16.mxu0 0
  %718 = vmatpush1.bf16.msra.mxu0 0
  %719 = vmatprep.subr.bf16.mxu0 0
  %720 = vmatpush1.bf16.msra.mxu0 0
  %721 = vmatprep.subr.bf16.mxu0 0
  %722 = vmatpush1.bf16.msra.mxu0 0
  %723 = vmatprep.subr.bf16.mxu0 0
  %724 = vmatpush1.bf16.msra.mxu0 0
  %725 = vmatprep.subr.bf16.mxu0 0
  %726 = vmatpush1.bf16.msra.mxu0 0
  %727 = vmatprep.subr.bf16.mxu0 0
  %728 = vmatpush1.bf16.msra.mxu0 0
  %729 = vmatprep.mubr.bf16.mxu0 0
  %730 = vmatmul.mubr.bf16.gmra.mrb[0].mxu0 %v143
  %v731 = vpop.f32.mrb[0].mxu0
  %v732 = vadd.f32 %v139, %v731
  %v733 = vpop.f32.mrb[0].mxu0
  %v734 = vadd.f32 %v139, %v733
  %v735 = vpop.f32.mrb[0].mxu0
  %v736 = vpop.f32.mrb[0].mxu0
  %737 = vdwg.mxu0
  %v738 = vmul.f32 %v732, 0.5
  %v739 = vmul.f32 %v734, 0.5
  %v740 = vmul.f32 %v732, 0.044715
  %v741 = vmul.f32 %v734, 0.044715
  %v742 = vmul.f32 %v740, %v732
  %v743 = vmul.f32 %v741, %v734
  %v744 = vmul.f32 %v742, %v732
  %v745 = vmul.f32 %v743, %v734
  %v746 = vadd.f32 %v732, %v744
  %v747 = vadd.f32 %v734, %v745
  %v748 = vmul.f32 %v746, 0.7978846
  %v749 = vmul.f32 %v747, 0.7978846
  %v750 = vtanh.pop %v748
  %v751 = vtanh.pop %v749
  %v752 = vadd.f32 %v750, 1.0
  %v753 = vadd.f32 %v751, 1.0
  %v754 = vmul.f32 %v738, %v752
  %v755 = vmul.f32 %v739, %v753
  %756 = vrot.lane.b32.xlu0 %v754, 17
  %v757 = vpop.permute.xlu0 %756
  %758 = vrot.lane.b32.xlu0 %v755, 17
  %v759 = vpop.permute.xlu0 %758
  %v760 = vsel %vm208, %v757, %v759
  %v761 = vsel %vm208, %v759, %v757
  %v762 = vmul.f32 %v761, %v74
  %v763 = vmul.f32 %v760, %v75
  %764 = vrot.lane.b32.xlu0 %v754, 16
  %v765 = vpop.permute.xlu0 %764
  %766 = vrot.lane.b32.xlu0 %v755, 16
  %v767 = vpop.permute.xlu0 %766
  %v768 = vsel %vm217, %v765, %v767
  %v769 = vsel %vm217, %v767, %v765
  %v770 = vmul.f32 %v769, %v78
  %v771 = vmul.f32 %v768, %v79
  %772 = vrot.lane.b32.xlu0 %v754, 15
  %v773 = vpop.permute.xlu0 %772
  %774 = vrot.lane.b32.xlu0 %v755, 15
  %v775 = vpop.permute.xlu0 %774
  %v776 = vsel %vm226, %v773, %v775
  %v777 = vsel %vm226, %v775, %v773
  %v778 = vmul.f32 %v777, %v84
  %v779 = vmul.f32 %v776, %v85
  %780 = vrot.lane.b32.xlu0 %v754, 1
  %v781 = vpop.permute.xlu0 %780
  %782 = vrot.lane.b32.xlu0 %v755, 1
  %v783 = vpop.permute.xlu0 %782
  %v784 = vsel %vm235, %v781, %v783
  %v785 = vsel %vm235, %v783, %v781
  %v786 = vmul.f32 %v785, %v88
  %v787 = vmul.f32 %v784, %v89
  %788 = vrot.lane.b32.xlu0 %v754, 127
  %v789 = vpop.permute.xlu0 %788
  %790 = vrot.lane.b32.xlu0 %v755, 127
  %v791 = vpop.permute.xlu0 %790
  %v792 = vsel %vm244, %v789, %v791
  %v793 = vsel %vm244, %v791, %v789
  %v794 = vmul.f32 %v792, %v92
  %v795 = vmul.f32 %v793, %v93
  %796 = vrot.lane.b32.xlu0 %v754, 113
  %v797 = vpop.permute.xlu0 %796
  %798 = vrot.lane.b32.xlu0 %v755, 113
  %v799 = vpop.permute.xlu0 %798
  %v800 = vsel %vm253, %v797, %v799
  %v801 = vsel %vm253, %v799, %v797
  %v802 = vmul.f32 %v800, %v98
  %v803 = vmul.f32 %v801, %v99
  %804 = vrot.lane.b32.xlu0 %v754, 112
  %v805 = vpop.permute.xlu0 %804
  %806 = vrot.lane.b32.xlu0 %v755, 112
  %v807 = vpop.permute.xlu0 %806
  %v808 = vsel %vm262, %v805, %v807
  %v809 = vsel %vm262, %v807, %v805
  %v810 = vmul.f32 %v808, %v102
  %v811 = vmul.f32 %v809, %v103
  %812 = vrot.lane.b32.xlu0 %v754, 111
  %v813 = vpop.permute.xlu0 %812
  %814 = vrot.lane.b32.xlu0 %v755, 111
  %v815 = vpop.permute.xlu0 %814
  %v816 = vsel %vm271, %v813, %v815
  %v817 = vsel %vm271, %v815, %v813
  %v818 = vmul.f32 %v816, %v108
  %v819 = vmul.f32 %v817, %v109
  %v820 = vpack.c.bf16 %v770, %v762
  %v821 = vpack.c.bf16 %v771, %v763
  %v822 = vpack.c.bf16 %v786, %v778
  %v823 = vpack.c.bf16 %v787, %v779
  %v824 = vpack.c.bf16 %v794, %v754
  %v825 = vpack.c.bf16 %v795, %v755
  %v826 = vpack.c.bf16 %v810, %v802
  %v827 = vpack.c.bf16 %v811, %v803
  %v828 = vpack.c.bf16 %v818, %v818
  %v829 = vpack.c.bf16 %v819, %v819
  %v831 = vsel %vm295, %v828, 0
  %v834 = vsel %vm295, %v829, 0
  %836 = vmatprep.subr.bf16.mxu0 %v821
  %837 = vmatpush1.bf16.msra.mxu0 %v820
  %838 = vmatprep.subr.bf16.mxu0 %v823
  %839 = vmatpush1.bf16.msra.mxu0 %v822
  %840 = vmatprep.subr.bf16.mxu0 %v825
  %841 = vmatpush1.bf16.msra.mxu0 %v824
  %842 = vmatprep.subr.bf16.mxu0 %v827
  %843 = vmatpush1.bf16.msra.mxu0 %v826
  %844 = vmatprep.subr.bf16.mxu0 %v834
  %845 = vmatpush1.bf16.msra.mxu0 %v831
  %846 = vmatprep.subr.bf16.mxu0 0
  %847 = vmatpush1.bf16.msra.mxu0 0
  %848 = vmatprep.subr.bf16.mxu0 0
  %849 = vmatpush1.bf16.msra.mxu0 0
  %850 = vmatprep.subr.bf16.mxu0 0
  %851 = vmatpush1.bf16.msra.mxu0 0
  %852 = vmatprep.subr.bf16.mxu0 0
  %853 = vmatpush1.bf16.msra.mxu0 0
  %854 = vmatprep.subr.bf16.mxu0 0
  %855 = vmatpush1.bf16.msra.mxu0 0
  %856 = vmatprep.subr.bf16.mxu0 0
  %857 = vmatpush1.bf16.msra.mxu0 0
  %858 = vmatprep.subr.bf16.mxu0 0
  %859 = vmatpush1.bf16.msra.mxu0 0
  %860 = vmatprep.subr.bf16.mxu0 0
  %861 = vmatpush1.bf16.msra.mxu0 0
  %862 = vmatprep.subr.bf16.mxu0 0
  %863 = vmatpush1.bf16.msra.mxu0 0
  %864 = vmatprep.subr.bf16.mxu0 0
  %865 = vmatpush1.bf16.msra.mxu0 0
  %866 = vmatprep.subr.bf16.mxu0 0
  %867 = vmatpush1.bf16.msra.mxu0 0
  %868 = vmatprep.mubr.bf16.mxu0 0
  %869 = vmatmul.mubr.bf16.gmra.mrb[0].mxu0 %v293
  %v870 = vpop.f32.mrb[0].mxu0
  %v871 = vadd.f32 %v289, %v870
  %v872 = vpop.f32.mrb[0].mxu0
  %v873 = vadd.f32 %v289, %v872
  %v874 = vpop.f32.mrb[0].mxu0
  %v875 = vpop.f32.mrb[0].mxu0
  %876 = vdwg.mxu0
  %v877 = vmul.f32 %v871, 0.5
  %v878 = vmul.f32 %v873, 0.5
  %v879 = vmul.f32 %v871, 0.044715
  %v880 = vmul.f32 %v873, 0.044715
  %v881 = vmul.f32 %v879, %v871
  %v882 = vmul.f32 %v880, %v873
  %v883 = vmul.f32 %v881, %v871
  %v884 = vmul.f32 %v882, %v873
  %v885 = vadd.f32 %v871, %v883
  %v886 = vadd.f32 %v873, %v884
  %v887 = vmul.f32 %v885, 0.7978846
  %v888 = vmul.f32 %v886, 0.7978846
  %v889 = vtanh.pop %v887
  %v890 = vtanh.pop %v888
  %v891 = vadd.f32 %v889, 1.0
  %v892 = vadd.f32 %v890, 1.0
  %v893 = vmul.f32 %v877, %v891
  %v894 = vmul.f32 %v878, %v892
  %895 = vrot.lane.b32.xlu0 %v893, 17
  %v896 = vpop.permute.xlu0 %895
  %897 = vrot.lane.b32.xlu0 %v894, 17
  %v898 = vpop.permute.xlu0 %897
  %v899 = vsel %vm208, %v896, %v898
  %v900 = vsel %vm208, %v898, %v896
  %v901 = vmul.f32 %v900, %v74
  %v902 = vmul.f32 %v899, %v75
  %903 = vrot.lane.b32.xlu0 %v893, 16
  %v904 = vpop.permute.xlu0 %903
  %905 = vrot.lane.b32.xlu0 %v894, 16
  %v906 = vpop.permute.xlu0 %905
  %v907 = vsel %vm217, %v904, %v906
  %v908 = vsel %vm217, %v906, %v904
  %v909 = vmul.f32 %v908, %v78
  %v910 = vmul.f32 %v907, %v79
  %911 = vrot.lane.b32.xlu0 %v893, 15
  %v912 = vpop.permute.xlu0 %911
  %913 = vrot.lane.b32.xlu0 %v894, 15
  %v914 = vpop.permute.xlu0 %913
  %v915 = vsel %vm226, %v912, %v914
  %v916 = vsel %vm226, %v914, %v912
  %v917 = vmul.f32 %v916, %v84
  %v918 = vmul.f32 %v915, %v85
  %919 = vrot.lane.b32.xlu0 %v893, 1
  %v920 = vpop.permute.xlu0 %919
  %921 = vrot.lane.b32.xlu0 %v894, 1
  %v922 = vpop.permute.xlu0 %921
  %v923 = vsel %vm235, %v920, %v922
  %v924 = vsel %vm235, %v922, %v920
  %v925 = vmul.f32 %v924, %v88
  %v926 = vmul.f32 %v923, %v89
  %927 = vrot.lane.b32.xlu0 %v893, 127
  %v928 = vpop.permute.xlu0 %927
  %929 = vrot.lane.b32.xlu0 %v894, 127
  %v930 = vpop.permute.xlu0 %929
  %v931 = vsel %vm244, %v928, %v930
  %v932 = vsel %vm244, %v930, %v928
  %v933 = vmul.f32 %v931, %v92
  %v934 = vmul.f32 %v932, %v93
  %935 = vrot.lane.b32.xlu0 %v893, 113
  %v936 = vpop.permute.xlu0 %935
  %937 = vrot.lane.b32.xlu0 %v894, 113
  %v938 = vpop.permute.xlu0 %937
  %v939 = vsel %vm253, %v936, %v938
  %v940 = vsel %vm253, %v938, %v936
  %v941 = vmul.f32 %v939, %v98
  %v942 = vmul.f32 %v940, %v99
  %943 = vrot.lane.b32.xlu0 %v893, 112
  %v944 = vpop.permute.xlu0 %943
  %945 = vrot.lane.b32.xlu0 %v894, 112
  %v946 = vpop.permute.xlu0 %945
  %v947 = vsel %vm262, %v944, %v946
  %v948 = vsel %vm262, %v946, %v944
  %v949 = vmul.f32 %v947, %v102
  %v950 = vmul.f32 %v948, %v103
  %951 = vrot.lane.b32.xlu0 %v893, 111
  %v952 = vpop.permute.xlu0 %951
  %953 = vrot.lane.b32.xlu0 %v894, 111
  %v954 = vpop.permute.xlu0 %953
  %v955 = vsel %vm271, %v952, %v954
  %v956 = vsel %vm271, %v954, %v952
  %v957 = vmul.f32 %v955, %v108
  %v958 = vmul.f32 %v956, %v109
  %v959 = vpack.c.bf16 %v909, %v901
  %v960 = vpack.c.bf16 %v910, %v902
  %v961 = vpack.c.bf16 %v925, %v917
  %v962 = vpack.c.bf16 %v926, %v918
  %v963 = vpack.c.bf16 %v933, %v893
  %v964 = vpack.c.bf16 %v934, %v894
  %v965 = vpack.c.bf16 %v949, %v941
  %v966 = vpack.c.bf16 %v950, %v942
  %v967 = vpack.c.bf16 %v957, %v957
  %v968 = vpack.c.bf16 %v958, %v958
  %v970 = vsel %vm295, %v967, 0
  %v973 = vsel %vm295, %v968, 0
  %975 = vmatprep.subr.bf16.mxu0 %v960
  %976 = vmatpush1.bf16.msra.mxu0 %v959
  %977 = vmatprep.subr.bf16.mxu0 %v962
  %978 = vmatpush1.bf16.msra.mxu0 %v961
  %979 = vmatprep.subr.bf16.mxu0 %v964
  %980 = vmatpush1.bf16.msra.mxu0 %v963
  %981 = vmatprep.subr.bf16.mxu0 %v966
  %982 = vmatpush1.bf16.msra.mxu0 %v965
  %983 = vmatprep.subr.bf16.mxu0 %v973
  %984 = vmatpush1.bf16.msra.mxu0 %v970
  %985 = vmatprep.subr.bf16.mxu0 0
  %986 = vmatpush1.bf16.msra.mxu0 0
  %987 = vmatprep.subr.bf16.mxu0 0
  %988 = vmatpush1.bf16.msra.mxu0 0
  %989 = vmatprep.subr.bf16.mxu0 0
  %990 = vmatpush1.bf16.msra.mxu0 0
  %991 = vmatprep.subr.bf16.mxu0 0
  %992 = vmatpush1.bf16.msra.mxu0 0
  %993 = vmatprep.subr.bf16.mxu0 0
  %994 = vmatpush1.bf16.msra.mxu0 0
  %995 = vmatprep.subr.bf16.mxu0 0
  %996 = vmatpush1.bf16.msra.mxu0 0
  %997 = vmatprep.subr.bf16.mxu0 0
  %998 = vmatpush1.bf16.msra.mxu0 0
  %999 = vmatprep.subr.bf16.mxu0 0
  %1000 = vmatpush1.bf16.msra.mxu0 0
  %1001 = vmatprep.subr.bf16.mxu0 0
  %1002 = vmatpush1.bf16.msra.mxu0 0
  %1003 = vmatprep.subr.bf16.mxu0 0
  %1004 = vmatpush1.bf16.msra.mxu0 0
  %1005 = vmatprep.subr.bf16.mxu0 0
  %1006 = vmatpush1.bf16.msra.mxu0 0
  %1007 = vmatprep.mubr.bf16.mxu0 0
  %1008 = vmatmul.mubr.bf16.gmra.mrb[0].mxu0 %v441
  %v1009 = vpop.f32.mrb[0].mxu0
  %v1010 = vadd.f32 %v438, %v1009
  %v1011 = vpop.f32.mrb[0].mxu0
  %v1012 = vadd.f32 %v438, %v1011
  %v1013 = vpop.f32.mrb[0].mxu0
  %v1014 = vpop.f32.mrb[0].mxu0
  %1015 = vdwg.mxu0
  %v1016 = vmul.f32 %v1010, 0.5
  %v1017 = vmul.f32 %v1012, 0.5
  %v1018 = vmul.f32 %v1010, 0.044715
  %v1019 = vmul.f32 %v1012, 0.044715
  %v1020 = vmul.f32 %v1018, %v1010
  %v1021 = vmul.f32 %v1019, %v1012
  %v1022 = vmul.f32 %v1020, %v1010
  %v1023 = vmul.f32 %v1021, %v1012
  %v1024 = vadd.f32 %v1010, %v1022
  %v1025 = vadd.f32 %v1012, %v1023
  %v1026 = vmul.f32 %v1024, 0.7978846
  %v1027 = vmul.f32 %v1025, 0.7978846
  %v1028 = vtanh.pop %v1026
  %v1029 = vtanh.pop %v1027
  %v1030 = vadd.f32 %v1028, 1.0
  %v1031 = vadd.f32 %v1029, 1.0
  %v1032 = vmul.f32 %v1016, %v1030
  %v1033 = vmul.f32 %v1017, %v1031
  %v1034 = vpack.c.bf16 %v1032, %v1032
  %v1035 = vpack.c.bf16 %v1033, %v1033
  %v1037 = vsel %vm295, %v1034, 0
  %v1040 = vsel %vm295, %v1035, 0
  %1042 = vmatprep.subr.bf16.mxu0 %v1040
  %1043 = vmatpush1.bf16.msra.mxu0 %v1037
  %1044 = vmatprep.subr.bf16.mxu0 0
  %1045 = vmatpush1.bf16.msra.mxu0 0
  %1046 = vmatprep.subr.bf16.mxu0 0
  %1047 = vmatpush1.bf16.msra.mxu0 0
  %1048 = vmatprep.subr.bf16.mxu0 0
  %1049 = vmatpush1.bf16.msra.mxu0 0
  %1050 = vmatprep.subr.bf16.mxu0 0
  %1051 = vmatpush1.bf16.msra.mxu0 0
  %1052 = vmatprep.subr.bf16.mxu0 0
  %1053 = vmatpush1.bf16.msra.mxu0 0
  %1054 = vmatprep.subr.bf16.mxu0 0
  %1055 = vmatpush1.bf16.msra.mxu0 0
  %1056 = vmatprep.subr.bf16.mxu0 0
  %1057 = vmatpush1.bf16.msra.mxu0 0
  %1058 = vmatprep.subr.bf16.mxu0 0
  %1059 = vmatpush1.bf16.msra.mxu0 0
  %1060 = vmatprep.subr.bf16.mxu0 0
  %1061 = vmatpush1.bf16.msra.mxu0 0
  %1062 = vmatprep.subr.bf16.mxu0 0
  %1063 = vmatpush1.bf16.msra.mxu0 0
  %1064 = vmatprep.subr.bf16.mxu0 0
  %1065 = vmatpush1.bf16.msra.mxu0 0
  %1066 = vmatprep.subr.bf16.mxu0 0
  %1067 = vmatpush1.bf16.msra.mxu0 0
  %1068 = vmatprep.subr.bf16.mxu0 0
  %1069 = vmatpush1.bf16.msra.mxu0 0
  %1070 = vmatprep.subr.bf16.mxu0 0
  %1071 = vmatpush1.bf16.msra.mxu0 0
  %1072 = vmatprep.subr.bf16.mxu0 0
  %1073 = vmatpush1.bf16.msra.mxu0 0
  %1074 = vmatprep.mubr.bf16.mxu0 0
  %1075 = vmatmul.mubr.bf16.gmra.mrb[0].mxu0 %v542
  %v1076 = vpop.f32.mrb[0].mxu0
  %v1077 = vadd.f32 %v513, %v1076
  %v1078 = vpop.f32.mrb[0].mxu0
  %v1079 = vadd.f32 %v513, %v1078
  %v1080 = vpop.f32.mrb[0].mxu0
  %v1081 = vadd.f32 %v518, %v1080
  %v1082 = vpop.f32.mrb[0].mxu0
  %v1083 = vadd.f32 %v518, %v1082
  %1084 = vmatprep.mubr.bf16.mxu0 0
  %1085 = vmatmul.mubr.bf16.gmra.mrb[0].mxu0 %v545
  %v1086 = vpop.f32.mrb[0].mxu0
  %v1087 = vadd.f32 %v523, %v1086
  %v1088 = vpop.f32.mrb[0].mxu0
  %v1089 = vadd.f32 %v523, %v1088
  %v1090 = vpop.f32.mrb[0].mxu0
  %v1091 = vadd.f32 %v528, %v1090
  %v1092 = vpop.f32.mrb[0].mxu0
  %v1093 = vadd.f32 %v528, %v1092
  %1094 = vdwg.mxu0
  %v1095 = vadd.f32 %v1077, %v685
  %v1096 = vadd.f32 %v1079, %v686
  %v1097 = vadd.f32 %v1081, %v687
  %v1098 = vadd.f32 %v1083, %v688
  %v1099 = vadd.f32 %v1087, %v689
  %v1100 = vadd.f32 %v1089, %v690
  %v1101 = vadd.f32 %v1091, %v691
  %v1102 = vadd.f32 %v1093, %v692
  %v1103 = vpack.c.bf16 %v1097, %v1095
  %v1104 = vpack.c.bf16 %v1098, %v1096
  %v1105 = vpack.c.bf16 %v1101, %v1099
  %v1106 = vpack.c.bf16 %v1102, %v1100
  %v1111 = vunpack.c.l.b16 %v1103
  %v1112 = vunpack.c.l.b16 %v1104
  %v1113 = vunpack.c.h.b16 %v1103
  %v1114 = vunpack.c.h.b16 %v1104
  %v1115 = vunpack.c.l.b16 %v1105
  %v1116 = vunpack.c.l.b16 %v1106
  %v1117 = vunpack.c.h.b16 %v1105
  %v1118 = vunpack.c.h.b16 %v1106
  %v1119 = vpack.c.b16 %v1112, %v1111
  %v1120 = vpack.c.b16 %v1114, %v1113
  %v1121 = vpack.c.b16 %v1116, %v1115
  %v1122 = vpack.c.b16 %v1118, %v1117
  %s1127 = scalar_lea.vmem %s9, 32
  %1128 = vst [vmem:[%s1127] sm:$0xff] %v1119
  %1129 = vst [vmem:[%s1127 + $0x8] sm:$0xff] %v1120
  %1130 = vst [vmem:[%s1127 + $0x10] sm:$0xff] %v1121
  %1131 = vst [vmem:[%s1127 + $0x18] sm:$0xff] %v1122
  %v1132 = vadd.f32 %v1095, %v1096
  %1133 = vadd.xlane.f32.xlu0 %v1132
  %v1134 = vpop.xlane.xlu0 %1133
  %v1135 = vadd.f32 %v1097, %v1098
  %1136 = vadd.xlane.f32.xlu0 %v1135
  %v1137 = vpop.xlane.xlu0 %1136
  %v1138 = vadd.f32 %v1099, %v1100
  %1139 = vadd.xlane.f32.xlu0 %v1138
  %v1140 = vpop.xlane.xlu0 %1139
  %v1141 = vadd.f32 %v1101, %v1102
  %1142 = vadd.xlane.f32.xlu0 %v1141
  %v1143 = vpop.xlane.xlu0 %1142
  %v1144 = vmul.f32 %v1095, %v1095
  %v1145 = vmul.f32 %v1096, %v1096
  %v1146 = vmul.f32 %v1097, %v1097
  %v1147 = vmul.f32 %v1098, %v1098
  %v1148 = vmul.f32 %v1099, %v1099
  %v1149 = vmul.f32 %v1100, %v1100
  %v1150 = vmul.f32 %v1101, %v1101
  %v1151 = vmul.f32 %v1102, %v1102
  %v1152 = vadd.f32 %v1144, %v1145
  %1153 = vadd.xlane.f32.xlu0 %v1152
  %v1154 = vpop.xlane.xlu0 %1153
  %v1155 = vadd.f32 %v1146, %v1147
  %1156 = vadd.xlane.f32.xlu0 %v1155
  %v1157 = vpop.xlane.xlu0 %1156
  %v1158 = vadd.f32 %v1148, %v1149
  %1159 = vadd.xlane.f32.xlu0 %v1158
  %v1160 = vpop.xlane.xlu0 %1159
  %v1161 = vadd.f32 %v1150, %v1151
  %1162 = vadd.xlane.f32.xlu0 %v1161
  %v1163 = vpop.xlane.xlu0 %1162
  %v1164 = vsel %vm674, %v1134, %v1154
  %v1165 = vsel %vm674, %v1137, %v1157
  %v1166 = vsel %vm674, %v1140, %v1160
  %v1167 = vsel %vm674, %v1143, %v1163
  %s1168 = scalar_lea.vmem %s10, 32
  %1169 = vst.msk [vmem:[%s1168] sm:$0xff] %vm679, %v1164
  %1170 = vst.msk [vmem:[%s1168 + $0x8] sm:$0xff] %vm679, %v1165
  %1171 = vst.msk [vmem:[%s1168 + $0x10] sm:$0xff] %vm679, %v1166
  %1172 = vst.msk [vmem:[%s1168 + $0x18] sm:$0xff] %vm679, %v1167
  // Predicated region
  $region38: #{decoding_block_forward.2} parent=0 // pred_check
    _
  $region39: #{decoding_block_forward.2} parent=0 // pred_check_branch
    %1174 = sbr.rel (0) target = $region41
  $region40: #{decoding_block_forward.2} parent=0 // pred_region
    _
  $region41: #{decoding_block_forward.2} parent=0 // pred_fallthru
    _
  // Predicated region
  $region42: #{decoding_block_forward.2} parent=0 // pred_check
    _
  $region43: #{decoding_block_forward.2} parent=0 // pred_check_branch
    %1176 = sbr.rel (0) target = $region45
  $region44: #{decoding_block_forward.2} parent=0 // pred_region
    _
  $region45: #{decoding_block_forward.2} parent=0 // pred_fallthru
    _
  // Predicated region
  $region46: #{decoding_block_forward.2} parent=0 // pred_check
    _
  $region47: #{decoding_block_forward.2} parent=0 // pred_check_branch
    %1178 = sbr.rel (0) target = $region49
  $region48: #{decoding_block_forward.2} parent=0 // pred_region
    _
  $region49: #{decoding_block_forward.2} parent=0 // pred_fallthru
    _
  // Predicated region
  $region50: #{decoding_block_forward.2} parent=0 // pred_check
    _
  $region51: #{decoding_block_forward.2} parent=0 // pred_check_branch
    %1180 = sbr.rel (0) target = $region53
  $region52: #{decoding_block_forward.2} parent=0 // pred_region
    _
  $region53: #{decoding_block_forward.2} parent=0 // pred_fallthru
    _

</llo_original>
